<compile_context>
chip_gen: v7x
topology: tpu7x:2x2x1
jax: 0.10.0
libtpu: 0.0.40
codegen_flags: <defaults>
</compile_context>

<pallas_src>
import jax
import jax.numpy as jnp
from jax.experimental import pallas as pl
from jax.experimental.pallas import tpu as pltpu


def _round_up(n, m):
    return ((n + m - 1) // m) * m


def residual_mlp_kernel(x_ref, w_in_ref, b_in_ref,
                        w1_ref, b1_ref, w2_ref, b2_ref,
                        w_out_ref, b_out_ref, o_ref):
    depth = w1_ref.shape[0]
    cdt = w_in_ref.dtype                      # MXU input dtype (bf16 or f32)

    # input layer: relu(x @ W_in + b_in), f32 accumulation on the MXU
    h = jnp.dot(x_ref[...].astype(cdt), w_in_ref[...],
                preferred_element_type=jnp.float32)
    h = jnp.maximum(h + b_in_ref[...], 0.0)

    def block(d, h):
        residual = h
        t = jnp.dot(h.astype(cdt), w1_ref[d],
                    preferred_element_type=jnp.float32)
        t = jnp.maximum(t + b1_ref[d], 0.0)
        # nn.Dropout(p) -> identity at inference time
        t = jnp.dot(t.astype(cdt), w2_ref[d],
                    preferred_element_type=jnp.float32) + b2_ref[d]
        return jnp.maximum(t + residual, 0.0)

    if depth <= 4:
        # small fixed depth: static unroll (full LLO scheduler visibility)
        for d in range(depth):
            h = block(d, h)
    else:
        # larger depth: bound live ranges / code size with a real loop,
        # dynamic first-axis indexing into the stacked weight refs.
        h = jax.lax.fori_loop(0, depth, block, h)

    # output layer (no activation)
    o_ref[...] = (jnp.dot(h.astype(cdt), w_out_ref[...],
                          preferred_element_type=jnp.float32)
                  + b_out_ref[...]).astype(o_ref.dtype)


def prepare_params(params, *, weight_dtype=jnp.bfloat16, feature_multiple=128):
    """One-time parameter prep — hoist out of the hot path.

    PyTorch nn.Linear stores (out, in); transpose to (in, out), zero-pad
    feature dims to `feature_multiple` (128 lanes; use 256 on v6e/v7x for
    real hidden sizes to fill the 256x256 MXU), stack the per-block weights
    and cast to `weight_dtype`.  Zero padding is mathematically inert.
    """
    F = params["w_in"].shape[1]
    H = params["w_in"].shape[0]
    O = params["w_out"].shape[0]
    depth = len(params["w1"])
    Fp = _round_up(F, feature_multiple)
    Hp = _round_up(H, feature_multiple)
    Op = _round_up(O, feature_multiple)

    def pad2(a, r, c):
        return jnp.pad(a, ((0, r - a.shape[0]), (0, c - a.shape[1])))

    prep = dict(
        w_in=pad2(params["w_in"].T, Fp, Hp).astype(weight_dtype),
        b_in=pad2(params["b_in"].reshape(1, -1), 1, Hp).astype(jnp.float32),
        w1=jnp.stack([pad2(w.T, Hp, Hp) for w in params["w1"]]).astype(weight_dtype),
        b1=jnp.stack([pad2(b.reshape(1, -1), 1, Hp)
                      for b in params["b1"]]).astype(jnp.float32),
        w2=jnp.stack([pad2(w.T, Hp, Hp) for w in params["w2"]]).astype(weight_dtype),
        b2=jnp.stack([pad2(b.reshape(1, -1), 1, Hp)
                      for b in params["b2"]]).astype(jnp.float32),
        w_out=pad2(params["w_out"].T, Hp, Op).astype(weight_dtype),
        b_out=pad2(params["b_out"].reshape(1, -1), 1, Op).astype(jnp.float32),
    )
    dims = dict(F=F, H=H, O=O, depth=depth, Fp=Fp, Hp=Hp, Op=Op)
    return prep, dims


def residual_mlp(x, prep, dims, *, block_b=512,
                 act_dtype=jnp.bfloat16, out_dtype=jnp.bfloat16):
    """x: [B, ...]; prep/dims from prepare_params()."""
    B = x.shape[0]
    F, O = dims["F"], dims["O"]
    Fp, Hp, Op, depth = dims["Fp"], dims["Hp"], dims["Op"], dims["depth"]

    # x.flatten(1), streamed in bf16 (half the per-step DMA bytes)
    x2d = x.reshape(B, -1).astype(act_dtype)
    assert x2d.shape[1] == F, "flattened feature size mismatch"

    # Batch tile: multiple of 16 (bf16 sublane pairs), capped at block_b, and
    # sized so the grid has >= 2 steps whenever possible (v7x has 2 TCs; with
    # grid=(1,) one core idles).  v5e/v6e: the big tile amortizes step overhead.
    tb_target = _round_up(max(1, -(-B // 2)), 16)
    TB = max(16, min(block_b, tb_target))
    Bp = _round_up(B, TB)

    x_p = jnp.pad(x2d, ((0, Bp - B), (0, Fp - F)))
    grid = (Bp // TB,)

    def resident(shape):
        # Weights/biases: block index is constant across grid steps -> stay
        # resident in VMEM, single-buffered (double-buffering them is waste).
        nd = len(shape)
        return pl.BlockSpec(shape, lambda i, _nd=nd: (0,) * _nd,
                            pipeline_mode=pl.Buffered(1))

    in_specs = [
        pl.BlockSpec((TB, Fp), lambda i: (i, 0)),        # x tile (streamed, 2-buf)
        resident((Fp, Hp)), resident((1, Hp)),           # input layer
        resident((depth, Hp, Hp)), resident((depth, 1, Hp)),   # block linear1
        resident((depth, Hp, Hp)), resident((depth, 1, Hp)),   # block linear2
        resident((Hp, Op)), resident((1, Op)),           # output layer
    ]
    out_spec = pl.BlockSpec((TB, Op), lambda i: (i, 0))

    # VMEM plan: resident weights (single-buffered) + double-buffered x/out
    # tiles + f32 intermediates; cap at 48 MiB (headroom under v7x's 64 MiB).
    w_itemsize = jnp.dtype(prep["w_in"].dtype).itemsize
    weight_bytes = (w_itemsize * (Fp * Hp + 2 * depth * Hp * Hp + Hp * Op)
                    + 4 * ((2 * depth + 1) * Hp + Op))
    stream_bytes = 2 * TB * (Fp * jnp.dtype(act_dtype).itemsize
                             + Op * jnp.dtype(out_dtype).itemsize)
    scratch_bytes = 6 * TB * Hp * 4
    vmem_limit = int(min(48 << 20,
                         max(16 << 20,
                             2 * (weight_bytes + stream_bytes + scratch_bytes))))

    cost = pl.CostEstimate(
        flops=int(2 * Bp * (Fp * Hp + 2 * depth * Hp * Hp + Hp * Op)),
        transcendentals=0,
        bytes_accessed=int(Bp * Fp * jnp.dtype(act_dtype).itemsize
                           + Bp * Op * jnp.dtype(out_dtype).itemsize
                           + weight_bytes),
    )

    out_padded = pl.pallas_call(
        residual_mlp_kernel,
        out_shape=jax.ShapeDtypeStruct((Bp, Op), out_dtype),
        grid=grid,
        in_specs=in_specs,
        out_specs=out_spec,
        compiler_params=pltpu.CompilerParams(
            dimension_semantics=("parallel",),           # megacore on v7x
            vmem_limit_bytes=vmem_limit,
        ),
        cost_estimate=cost,
    )(x_p, prep["w_in"], prep["b_in"], prep["w1"], prep["b1"],
      prep["w2"], prep["b2"], prep["w_out"], prep["b_out"])

    return out_padded[:B, :O]


def make_params(key, input_size, hidden_size, output_size, depth):
    """Deterministic synthetic parameters (PyTorch nn.Linear shape convention)."""
    keys = jax.random.split(key, 4 + 4 * depth)
    i = iter(range(len(keys)))

    def lin(k_w, k_b, out_f, in_f):
        scale = 1.0 / jnp.sqrt(in_f)
        w = jax.random.uniform(k_w, (out_f, in_f), jnp.float32, -scale, scale)
        b = jax.random.uniform(k_b, (out_f,), jnp.float32, -scale, scale)
        return w, b

    w_in, b_in = lin(keys[next(i)], keys[next(i)], hidden_size, input_size)
    w1, b1, w2, b2 = [], [], [], []
    for _ in range(depth):
        w, b = lin(keys[next(i)], keys[next(i)], hidden_size, hidden_size)
        w1.append(w); b1.append(b)
        w, b = lin(keys[next(i)], keys[next(i)], hidden_size, hidden_size)
        w2.append(w); b2.append(b)
    w_out, b_out = lin(keys[next(i)], keys[next(i)], output_size, hidden_size)

    return dict(w_in=w_in, b_in=b_in, w1=w1, b1=b1, w2=w2, b2=b2,
                w_out=w_out, b_out=b_out)


def residual_mlp_ref(x, params):
    """Pure-JAX f32 reference with identical semantics (eval-mode dropout)."""
    h = x.reshape(x.shape[0], -1).astype(jnp.float32)
    h = jnp.maximum(h @ params["w_in"].T + params["b_in"], 0.0)
    for w1, b1, w2, b2 in zip(params["w1"], params["b1"],
                              params["w2"], params["b2"]):
        r = h
        t = jnp.maximum(h @ w1.T + b1, 0.0)
        t = t @ w2.T + b2
        h = jnp.maximum(t + r, 0.0)
    return h @ params["w_out"].T + params["b_out"]


if __name__ == "__main__":
    # image (2,4,4) -> input_size=32, hidden=32, out=16, depth=2
    # batch 256 so the parallel batch grid (TB=128 -> grid=(2,)) is exercised.
    B, C, Hd, Wd = 256, 2, 4, 4
    input_size = C * Hd * Wd        # 32
    hidden_size = 32
    output_size = 16
    depth = 2

    key = jax.random.PRNGKey(0)
    k_x, k_p, k_p2 = jax.random.split(key, 3)
    x = jax.random.normal(k_x, (B, C, Hd, Wd), jnp.float32)
    params = make_params(k_p, input_size, hidden_size, output_size, depth)

    # one-time (hoisted) parameter prep; jit the hot path
    prep, dims = prepare_params(params)
    run = jax.jit(lambda xx: residual_mlp(xx, prep, dims))
    out = jax.block_until_ready(run(x))

    ref = residual_mlp_ref(x, params)
    assert out.shape == (B, output_size)
    # bf16 weights + bf16 streamed activations + bf16 output (f32 accumulation)
    assert jnp.allclose(out.astype(jnp.float32), ref, atol=5e-2, rtol=5e-2)

    # Second config: depth=5 exercises the lax.fori_loop path with dynamic
    # w1_ref[d]/w2_ref[d] indexing; kept in f32 so the check is only about the
    # loop/indexing correctness, not accumulated low-precision noise.
    B2, depth2 = 64, 5
    x2 = jax.random.normal(k_x, (B2, C, Hd, Wd), jnp.float32)
    params2 = make_params(k_p2, input_size, hidden_size, output_size, depth2)
    prep2, dims2 = prepare_params(params2, weight_dtype=jnp.float32)
    out2 = residual_mlp(x2, prep2, dims2,
                        act_dtype=jnp.float32, out_dtype=jnp.float32)
    out2 = jax.block_until_ready(out2)
    ref2 = residual_mlp_ref(x2, params2)
    assert out2.shape == (B2, output_size)
    assert jnp.allclose(out2, ref2, atol=5e-2, rtol=5e-2)

    print("KERNEL_OK")
</pallas_src>

<mosaic_0001>
module attributes {stable_mosaic.version = 11 : i64} {
  func.func @residual_mlp_kernel(%arg0: i32, %arg1: memref<128x128xbf16, #tpu.memory_space<vmem>>, %arg2: memref<128x128xbf16, #tpu.memory_space<vmem>>, %arg3: memref<1x128xf32, #tpu.memory_space<vmem>>, %arg4: memref<2x128x128xbf16, #tpu.memory_space<vmem>>, %arg5: memref<2x1x128xf32, #tpu.memory_space<vmem>>, %arg6: memref<2x128x128xbf16, #tpu.memory_space<vmem>>, %arg7: memref<2x1x128xf32, #tpu.memory_space<vmem>>, %arg8: memref<128x128xbf16, #tpu.memory_space<vmem>>, %arg9: memref<1x128xf32, #tpu.memory_space<vmem>>, %arg10: memref<128x128xbf16, #tpu.memory_space<vmem>>) attributes {dimension_semantics = [#tpu.dimension_semantics<parallel>], iteration_bounds = array<i64: 2>, scalar_prefetch = 0 : i64, scratch_operands = 0 : i64, tpu.core_type = #tpu.core_type<tc>, window_params = [{transform_indices = @transform_0, window_bounds = array<i64: 128, 128>}, {pipeline_mode = #tpu.pipeline_mode<synchronous>, transform_indices = @transform_1, window_bounds = array<i64: 128, 128>}, {pipeline_mode = #tpu.pipeline_mode<synchronous>, transform_indices = @transform_2, window_bounds = array<i64: 1, 128>}, {pipeline_mode = #tpu.pipeline_mode<synchronous>, transform_indices = @transform_3, window_bounds = array<i64: 2, 128, 128>}, {pipeline_mode = #tpu.pipeline_mode<synchronous>, transform_indices = @transform_4, window_bounds = array<i64: 2, 1, 128>}, {pipeline_mode = #tpu.pipeline_mode<synchronous>, transform_indices = @transform_5, window_bounds = array<i64: 2, 128, 128>}, {pipeline_mode = #tpu.pipeline_mode<synchronous>, transform_indices = @transform_6, window_bounds = array<i64: 2, 1, 128>}, {pipeline_mode = #tpu.pipeline_mode<synchronous>, transform_indices = @transform_7, window_bounds = array<i64: 128, 128>}, {pipeline_mode = #tpu.pipeline_mode<synchronous>, transform_indices = @transform_8, window_bounds = array<i64: 1, 128>}, {transform_indices = @transform_9, window_bounds = array<i64: 128, 128>}]} {
    %c0 = arith.constant 0 : index
    %c0_0 = arith.constant 0 : index
    %0 = vector.load %arg1[%c0, %c0_0] : memref<128x128xbf16, #tpu.memory_space<vmem>>, vector<128x128xbf16>
    %c0_1 = arith.constant 0 : index
    %c0_2 = arith.constant 0 : index
    %1 = vector.load %arg2[%c0_1, %c0_2] : memref<128x128xbf16, #tpu.memory_space<vmem>>, vector<128x128xbf16>
    %cst = arith.constant dense<0.000000e+00> : vector<128x128xf32>
    %2 = tpu.matmul %0, %1, %cst {dimension_numbers = #tpu.dot_dimension_numbers<[1], [0], [0], [1], [0, 0, 1, 1], [], []>} : vector<128x128xbf16>, vector<128x128xbf16>, vector<128x128xf32> -> vector<128x128xf32>
    %c0_3 = arith.constant 0 : index
    %c0_4 = arith.constant 0 : index
    %3 = vector.load %arg3[%c0_3, %c0_4] : memref<1x128xf32, #tpu.memory_space<vmem>>, vector<1x128xf32>
    %4 = vector.broadcast %3 : vector<1x128xf32> to vector<128x128xf32>
    %5 = arith.addf %2, %4 : vector<128x128xf32>
    %cst_5 = arith.constant 0.000000e+00 : f32
    %6 = vector.broadcast %cst_5 : f32 to vector<128x128xf32>
    %7 = arith.maximumf %5, %6 : vector<128x128xf32>
    %8 = arith.truncf %7 : vector<128x128xf32> to vector<128x128xbf16>
    %c0_6 = arith.constant 0 : index
    %c0_7 = arith.constant 0 : index
    %c0_8 = arith.constant 0 : index
    %9 = vector.load %arg4[%c0_6, %c0_7, %c0_8] : memref<2x128x128xbf16, #tpu.memory_space<vmem>>, vector<1x128x128xbf16>
    %10 = vector.shape_cast %9 : vector<1x128x128xbf16> to vector<128x128xbf16>
    %cst_9 = arith.constant dense<0.000000e+00> : vector<128x128xf32>
    %11 = tpu.matmul %8, %10, %cst_9 {dimension_numbers = #tpu.dot_dimension_numbers<[1], [0], [0], [1], [0, 0, 1, 1], [], []>} : vector<128x128xbf16>, vector<128x128xbf16>, vector<128x128xf32> -> vector<128x128xf32>
    %c0_10 = arith.constant 0 : index
    %c0_11 = arith.constant 0 : index
    %c0_12 = arith.constant 0 : index
    %12 = vector.load %arg5[%c0_10, %c0_11, %c0_12] : memref<2x1x128xf32, #tpu.memory_space<vmem>>, vector<1x1x128xf32>
    %13 = vector.shape_cast %12 : vector<1x1x128xf32> to vector<1x128xf32>
    %14 = vector.broadcast %13 : vector<1x128xf32> to vector<128x128xf32>
    %15 = arith.addf %11, %14 : vector<128x128xf32>
    %cst_13 = arith.constant 0.000000e+00 : f32
    %16 = vector.broadcast %cst_13 : f32 to vector<128x128xf32>
    %17 = arith.maximumf %15, %16 : vector<128x128xf32>
    %18 = arith.truncf %17 : vector<128x128xf32> to vector<128x128xbf16>
    %c0_14 = arith.constant 0 : index
    %c0_15 = arith.constant 0 : index
    %c0_16 = arith.constant 0 : index
    %19 = vector.load %arg6[%c0_14, %c0_15, %c0_16] : memref<2x128x128xbf16, #tpu.memory_space<vmem>>, vector<1x128x128xbf16>
    %20 = vector.shape_cast %19 : vector<1x128x128xbf16> to vector<128x128xbf16>
    %cst_17 = arith.constant dense<0.000000e+00> : vector<128x128xf32>
    %21 = tpu.matmul %18, %20, %cst_17 {dimension_numbers = #tpu.dot_dimension_numbers<[1], [0], [0], [1], [0, 0, 1, 1], [], []>} : vector<128x128xbf16>, vector<128x128xbf16>, vector<128x128xf32> -> vector<128x128xf32>
    %c0_18 = arith.constant 0 : index
    %c0_19 = arith.constant 0 : index
    %c0_20 = arith.constant 0 : index
    %22 = vector.load %arg7[%c0_18, %c0_19, %c0_20] : memref<2x1x128xf32, #tpu.memory_space<vmem>>, vector<1x1x128xf32>
    %23 = vector.shape_cast %22 : vector<1x1x128xf32> to vector<1x128xf32>
    %24 = vector.broadcast %23 : vector<1x128xf32> to vector<128x128xf32>
    %25 = arith.addf %21, %24 : vector<128x128xf32>
    %26 = arith.addf %25, %7 : vector<128x128xf32>
    %cst_21 = arith.constant 0.000000e+00 : f32
    %27 = vector.broadcast %cst_21 : f32 to vector<128x128xf32>
    %28 = arith.maximumf %26, %27 : vector<128x128xf32>
    %29 = arith.truncf %28 : vector<128x128xf32> to vector<128x128xbf16>
    %c1 = arith.constant 1 : index
    %c0_22 = arith.constant 0 : index
    %c0_23 = arith.constant 0 : index
    %30 = vector.load %arg4[%c1, %c0_22, %c0_23] : memref<2x128x128xbf16, #tpu.memory_space<vmem>>, vector<1x128x128xbf16>
    %31 = vector.shape_cast %30 : vector<1x128x128xbf16> to vector<128x128xbf16>
    %cst_24 = arith.constant dense<0.000000e+00> : vector<128x128xf32>
    %32 = tpu.matmul %29, %31, %cst_24 {dimension_numbers = #tpu.dot_dimension_numbers<[1], [0], [0], [1], [0, 0, 1, 1], [], []>} : vector<128x128xbf16>, vector<128x128xbf16>, vector<128x128xf32> -> vector<128x128xf32>
    %c1_25 = arith.constant 1 : index
    %c0_26 = arith.constant 0 : index
    %c0_27 = arith.constant 0 : index
    %33 = vector.load %arg5[%c1_25, %c0_26, %c0_27] : memref<2x1x128xf32, #tpu.memory_space<vmem>>, vector<1x1x128xf32>
    %34 = vector.shape_cast %33 : vector<1x1x128xf32> to vector<1x128xf32>
    %35 = vector.broadcast %34 : vector<1x128xf32> to vector<128x128xf32>
    %36 = arith.addf %32, %35 : vector<128x128xf32>
    %cst_28 = arith.constant 0.000000e+00 : f32
    %37 = vector.broadcast %cst_28 : f32 to vector<128x128xf32>
    %38 = arith.maximumf %36, %37 : vector<128x128xf32>
    %39 = arith.truncf %38 : vector<128x128xf32> to vector<128x128xbf16>
    %c1_29 = arith.constant 1 : index
    %c0_30 = arith.constant 0 : index
    %c0_31 = arith.constant 0 : index
    %40 = vector.load %arg6[%c1_29, %c0_30, %c0_31] : memref<2x128x128xbf16, #tpu.memory_space<vmem>>, vector<1x128x128xbf16>
    %41 = vector.shape_cast %40 : vector<1x128x128xbf16> to vector<128x128xbf16>
    %cst_32 = arith.constant dense<0.000000e+00> : vector<128x128xf32>
    %42 = tpu.matmul %39, %41, %cst_32 {dimension_numbers = #tpu.dot_dimension_numbers<[1], [0], [0], [1], [0, 0, 1, 1], [], []>} : vector<128x128xbf16>, vector<128x128xbf16>, vector<128x128xf32> -> vector<128x128xf32>
    %c1_33 = arith.constant 1 : index
    %c0_34 = arith.constant 0 : index
    %c0_35 = arith.constant 0 : index
    %43 = vector.load %arg7[%c1_33, %c0_34, %c0_35] : memref<2x1x128xf32, #tpu.memory_space<vmem>>, vector<1x1x128xf32>
    %44 = vector.shape_cast %43 : vector<1x1x128xf32> to vector<1x128xf32>
    %45 = vector.broadcast %44 : vector<1x128xf32> to vector<128x128xf32>
    %46 = arith.addf %42, %45 : vector<128x128xf32>
    %47 = arith.addf %46, %28 : vector<128x128xf32>
    %cst_36 = arith.constant 0.000000e+00 : f32
    %48 = vector.broadcast %cst_36 : f32 to vector<128x128xf32>
    %49 = arith.maximumf %47, %48 : vector<128x128xf32>
    %50 = arith.truncf %49 : vector<128x128xf32> to vector<128x128xbf16>
    %c0_37 = arith.constant 0 : index
    %c0_38 = arith.constant 0 : index
    %51 = vector.load %arg8[%c0_37, %c0_38] : memref<128x128xbf16, #tpu.memory_space<vmem>>, vector<128x128xbf16>
    %cst_39 = arith.constant dense<0.000000e+00> : vector<128x128xf32>
    %52 = tpu.matmul %50, %51, %cst_39 {dimension_numbers = #tpu.dot_dimension_numbers<[1], [0], [0], [1], [0, 0, 1, 1], [], []>} : vector<128x128xbf16>, vector<128x128xbf16>, vector<128x128xf32> -> vector<128x128xf32>
    %c0_40 = arith.constant 0 : index
    %c0_41 = arith.constant 0 : index
    %53 = vector.load %arg9[%c0_40, %c0_41] : memref<1x128xf32, #tpu.memory_space<vmem>>, vector<1x128xf32>
    %54 = vector.broadcast %53 : vector<1x128xf32> to vector<128x128xf32>
    %55 = arith.addf %52, %54 : vector<128x128xf32>
    %56 = arith.truncf %55 : vector<128x128xf32> to vector<128x128xbf16>
    %c0_42 = arith.constant 0 : index
    %c0_43 = arith.constant 0 : index
    %57 = vector.load %arg10[%c0_42, %c0_43] : memref<128x128xbf16, #tpu.memory_space<vmem>>, vector<128x128xbf16>
    tpu.vector_store %arg10[%c0_42, %c0_43], %56 {strides = array<i32>} : memref<128x128xbf16, #tpu.memory_space<vmem>>, vector<128x128xbf16>,
    return
  }
  func.func @transform_0(%arg0: i32) -> (i32, i32) {
    %c0_i32 = arith.constant 0 : i32
    %c0_i32_0 = arith.constant 0 : i32
    return %arg0, %c0_i32 : i32, i32
  }
  func.func @transform_1(%arg0: i32) -> (i32, i32) {
    %c0_i32 = arith.constant 0 : i32
    %c0_i32_0 = arith.constant 0 : i32
    %c0_i32_1 = arith.constant 0 : i32
    return %c0_i32, %c0_i32_0 : i32, i32
  }
  func.func @transform_2(%arg0: i32) -> (i32, i32) {
    %c0_i32 = arith.constant 0 : i32
    %c0_i32_0 = arith.constant 0 : i32
    %c0_i32_1 = arith.constant 0 : i32
    return %c0_i32, %c0_i32_0 : i32, i32
  }
  func.func @transform_3(%arg0: i32) -> (i32, i32, i32) {
    %c0_i32 = arith.constant 0 : i32
    %c0_i32_0 = arith.constant 0 : i32
    %c0_i32_1 = arith.constant 0 : i32
    %c0_i32_2 = arith.constant 0 : i32
    return %c0_i32, %c0_i32_0, %c0_i32_1 : i32, i32, i32
  }
  func.func @transform_4(%arg0: i32) -> (i32, i32, i32) {
    %c0_i32 = arith.constant 0 : i32
    %c0_i32_0 = arith.constant 0 : i32
    %c0_i32_1 = arith.constant 0 : i32
    %c0_i32_2 = arith.constant 0 : i32
    return %c0_i32, %c0_i32_0, %c0_i32_1 : i32, i32, i32
  }
  func.func @transform_5(%arg0: i32) -> (i32, i32, i32) {
    %c0_i32 = arith.constant 0 : i32
    %c0_i32_0 = arith.constant 0 : i32
    %c0_i32_1 = arith.constant 0 : i32
    %c0_i32_2 = arith.constant 0 : i32
    return %c0_i32, %c0_i32_0, %c0_i32_1 : i32, i32, i32
  }
  func.func @transform_6(%arg0: i32) -> (i32, i32, i32) {
    %c0_i32 = arith.constant 0 : i32
    %c0_i32_0 = arith.constant 0 : i32
    %c0_i32_1 = arith.constant 0 : i32
    %c0_i32_2 = arith.constant 0 : i32
    return %c0_i32, %c0_i32_0, %c0_i32_1 : i32, i32, i32
  }
  func.func @transform_7(%arg0: i32) -> (i32, i32) {
    %c0_i32 = arith.constant 0 : i32
    %c0_i32_0 = arith.constant 0 : i32
    %c0_i32_1 = arith.constant 0 : i32
    return %c0_i32, %c0_i32_0 : i32, i32
  }
  func.func @transform_8(%arg0: i32) -> (i32, i32) {
    %c0_i32 = arith.constant 0 : i32
    %c0_i32_0 = arith.constant 0 : i32
    %c0_i32_1 = arith.constant 0 : i32
    return %c0_i32, %c0_i32_0 : i32, i32
  }
  func.func @transform_9(%arg0: i32) -> (i32, i32) {
    %c0_i32 = arith.constant 0 : i32
    %c0_i32_0 = arith.constant 0 : i32
    return %arg0, %c0_i32 : i32, i32
  }
}

</mosaic_0001>

<llo_original>
// kernel: _lambda_.1
$region0: #{_lambda_.1}
  #allocation0 [shape = 'u32[]', space=smem, size = 0x4, offset = 0x4, fixed_abs, tag = 'smem constant byte address 0x4 - core index']
  #allocation1 [shape = 'u32[144,128]{1,0:T(1,128)}', space=vmem, size = 0x12000, scoped, tag = 'internal scratch']
  %s0 = inlined_call_operand.vmem [shape: bf16[256,128], index: 0, kind: input, shape index: {}]
  %s1 = inlined_call_operand.vmem [shape: bf16[128,128], index: 1, kind: input, shape index: {}]
  %s2 = inlined_call_operand.vmem [shape: f32[1,128], index: 2, kind: input, shape index: {}]
  %s3 = inlined_call_operand.vmem [shape: bf16[2,128,128], index: 3, kind: input, shape index: {}]
  %s4 = inlined_call_operand.vmem [shape: f32[2,1,128], index: 4, kind: input, shape index: {}]
  %s5 = inlined_call_operand.vmem [shape: bf16[2,128,128], index: 5, kind: input, shape index: {}]
  %s6 = inlined_call_operand.vmem [shape: f32[2,1,128], index: 6, kind: input, shape index: {}]
  %s7 = inlined_call_operand.vmem [shape: bf16[128,128], index: 7, kind: input, shape index: {}]
  %s8 = inlined_call_operand.vmem [shape: f32[1,128], index: 8, kind: input, shape index: {}]
  %s9 = inlined_call_operand.vmem [shape: bf16[256,128], index: 9, kind: output, shape index: {}]
  %s10 = sld [smem:[#allocation0]]
  $region69: #{_lambda_.1} parent=0
    _
  %s12 = ssub.s32 1, %s10
  %s13 = scalar_select 0, %s12, %s10
  loop: start=0, step=1, limit=4
  $region2: #{_lambda_.1} parent=0 // loop_pre_header
    _
  $region3: #{_lambda_.1} parent=0 // loop_header
    %s15 = sphi 0, %s19
    %p16 = scmp.ge.s32.totalorder %s15, 4
    %s25 = sphi 0, %s27
    %s28 = sphi 0, %s25
    %s29 = sphi 0, %s28
    %s45 = sphi 0, %s29
    %s49 = sphi 0, %s49
    %s51 = sphi 0, %s49
    %s52 = sphi 0, %s51
    %s66 = sphi 0, %s52
    %s70 = sphi 0, %s70
    %s72 = sphi 0, %s70
    %s73 = sphi 0, %s72
    %s87 = sphi 0, %s73
    %s91 = sphi 0, %s91
    %s93 = sphi 0, %s91
    %s94 = sphi 0, %s93
    %s108 = sphi 0, %s94
    %s112 = sphi 0, %s112
    %s114 = sphi 0, %s112
    %s115 = sphi 0, %s114
    %s129 = sphi 0, %s115
    %s133 = sphi 0, %s133
    %s135 = sphi 0, %s133
    %s136 = sphi 0, %s135
    %s150 = sphi 0, %s136
    %s154 = sphi 0, %s154
    %s156 = sphi 0, %s154
    %s157 = sphi 0, %s156
    %s171 = sphi 0, %s157
    %s175 = sphi 0, %s175
    %s177 = sphi 0, %s175
    %s178 = sphi 0, %s177
    %s192 = sphi 0, %s178
    %s196 = sphi 0, %s196
    %s198 = sphi 0, %s196
    %s199 = sphi 0, %s198
    %s213 = sphi 0, %s199
    %s219 = sphi 0, %s221
    %s222 = sphi 0, %s219
    %s223 = sphi 0, %s222
    %s239 = sphi 0, %s223
  $region4: #{_lambda_.1} parent=0 // loop_header_branch
    %18 = sbr.rel (%p16) target = $region8
  $region5: #{_lambda_.1} parent=0 // loop_body
    %s20 = ssub.s32 %s15, 1
    %s21 = ssub.s32 %s15, 2
    %s22 = sadd.s32 %s15, 1
    %s23 = ssub.s32 %s15, %s22
    %p24 = scmp.eq.s32.totalorder %s23, 0
    %s26 = sadd.s32 %s25, 1
    %s27 = scalar_select %p24, %s25, %s26
    %p30 = pneg %p24
    %p31 = scmp.eq.s32.totalorder %s15, 1
    %p32 = por %p30, %p31
    %p33 = scmp.ne.s32.totalorder %s25, %s28
    %p34 = scmp.eq.s32.totalorder %s15, 0
    %p35 = por %p33, %p34
    %p36 = scmp.ne.s32.totalorder %s25, %s28
    %p37 = scmp.eq.s32.totalorder %s20, 1
    %p38 = por %p36, %p37
    %p39 = scmp.ne.s32.totalorder %s28, %s29
    %p40 = scmp.eq.s32.totalorder %s20, 0
    %p41 = por %p39, %p40
    %p42 = scmp.ne.s32.totalorder %s28, %s29
    %p43 = scmp.eq.s32.totalorder %s21, 1
    %p44 = por %p42, %p43
    %p46 = scmp.ne.s32.totalorder %s29, %s45
    %p47 = scmp.eq.s32.totalorder %s21, 0
    %p48 = por %p46, %p47
    %s50 = sadd.s32 %s49, 1
    %p53 = scmp.eq.s32.totalorder %s15, 1
    %p54 = scmp.ne.s32.totalorder %s49, %s51
    %p55 = scmp.eq.s32.totalorder %s15, 0
    %p56 = por %p54, %p55
    %p57 = scmp.ne.s32.totalorder %s49, %s51
    %p58 = scmp.eq.s32.totalorder %s20, 1
    %p59 = por %p57, %p58
    %p60 = scmp.ne.s32.totalorder %s51, %s52
    %p61 = scmp.eq.s32.totalorder %s20, 0
    %p62 = por %p60, %p61
    %p63 = scmp.ne.s32.totalorder %s51, %s52
    %p64 = scmp.eq.s32.totalorder %s21, 1
    %p65 = por %p63, %p64
    %p67 = scmp.ne.s32.totalorder %s52, %s66
    %p68 = scmp.eq.s32.totalorder %s21, 0
    %p69 = por %p67, %p68
    %s71 = sadd.s32 %s70, 1
    %p74 = scmp.eq.s32.totalorder %s15, 1
    %p75 = scmp.ne.s32.totalorder %s70, %s72
    %p76 = scmp.eq.s32.totalorder %s15, 0
    %p77 = por %p75, %p76
    %p78 = scmp.ne.s32.totalorder %s70, %s72
    %p79 = scmp.eq.s32.totalorder %s20, 1
    %p80 = por %p78, %p79
    %p81 = scmp.ne.s32.totalorder %s72, %s73
    %p82 = scmp.eq.s32.totalorder %s20, 0
    %p83 = por %p81, %p82
    %p84 = scmp.ne.s32.totalorder %s72, %s73
    %p85 = scmp.eq.s32.totalorder %s21, 1
    %p86 = por %p84, %p85
    %p88 = scmp.ne.s32.totalorder %s73, %s87
    %p89 = scmp.eq.s32.totalorder %s21, 0
    %p90 = por %p88, %p89
    %s92 = sadd.s32 %s91, 1
    %p95 = scmp.eq.s32.totalorder %s15, 1
    %p96 = scmp.ne.s32.totalorder %s91, %s93
    %p97 = scmp.eq.s32.totalorder %s15, 0
    %p98 = por %p96, %p97
    %p99 = scmp.ne.s32.totalorder %s91, %s93
    %p100 = scmp.eq.s32.totalorder %s20, 1
    %p101 = por %p99, %p100
    %p102 = scmp.ne.s32.totalorder %s93, %s94
    %p103 = scmp.eq.s32.totalorder %s20, 0
    %p104 = por %p102, %p103
    %p105 = scmp.ne.s32.totalorder %s93, %s94
    %p106 = scmp.eq.s32.totalorder %s21, 1
    %p107 = por %p105, %p106
    %p109 = scmp.ne.s32.totalorder %s94, %s108
    %p110 = scmp.eq.s32.totalorder %s21, 0
    %p111 = por %p109, %p110
    %s113 = sadd.s32 %s112, 1
    %p116 = scmp.eq.s32.totalorder %s15, 1
    %p117 = scmp.ne.s32.totalorder %s112, %s114
    %p118 = scmp.eq.s32.totalorder %s15, 0
    %p119 = por %p117, %p118
    %p120 = scmp.ne.s32.totalorder %s112, %s114
    %p121 = scmp.eq.s32.totalorder %s20, 1
    %p122 = por %p120, %p121
    %p123 = scmp.ne.s32.totalorder %s114, %s115
    %p124 = scmp.eq.s32.totalorder %s20, 0
    %p125 = por %p123, %p124
    %p126 = scmp.ne.s32.totalorder %s114, %s115
    %p127 = scmp.eq.s32.totalorder %s21, 1
    %p128 = por %p126, %p127
    %p130 = scmp.ne.s32.totalorder %s115, %s129
    %p131 = scmp.eq.s32.totalorder %s21, 0
    %p132 = por %p130, %p131
    %s134 = sadd.s32 %s133, 1
    %p137 = scmp.eq.s32.totalorder %s15, 1
    %p138 = scmp.ne.s32.totalorder %s133, %s135
    %p139 = scmp.eq.s32.totalorder %s15, 0
    %p140 = por %p138, %p139
    %p141 = scmp.ne.s32.totalorder %s133, %s135
    %p142 = scmp.eq.s32.totalorder %s20, 1
    %p143 = por %p141, %p142
    %p144 = scmp.ne.s32.totalorder %s135, %s136
    %p145 = scmp.eq.s32.totalorder %s20, 0
    %p146 = por %p144, %p145
    %p147 = scmp.ne.s32.totalorder %s135, %s136
    %p148 = scmp.eq.s32.totalorder %s21, 1
    %p149 = por %p147, %p148
    %p151 = scmp.ne.s32.totalorder %s136, %s150
    %p152 = scmp.eq.s32.totalorder %s21, 0
    %p153 = por %p151, %p152
    %s155 = sadd.s32 %s154, 1
    %p158 = scmp.eq.s32.totalorder %s15, 1
    %p159 = scmp.ne.s32.totalorder %s154, %s156
    %p160 = scmp.eq.s32.totalorder %s15, 0
    %p161 = por %p159, %p160
    %p162 = scmp.ne.s32.totalorder %s154, %s156
    %p163 = scmp.eq.s32.totalorder %s20, 1
    %p164 = por %p162, %p163
    %p165 = scmp.ne.s32.totalorder %s156, %s157
    %p166 = scmp.eq.s32.totalorder %s20, 0
    %p167 = por %p165, %p166
    %p168 = scmp.ne.s32.totalorder %s156, %s157
    %p169 = scmp.eq.s32.totalorder %s21, 1
    %p170 = por %p168, %p169
    %p172 = scmp.ne.s32.totalorder %s157, %s171
    %p173 = scmp.eq.s32.totalorder %s21, 0
    %p174 = por %p172, %p173
    %s176 = sadd.s32 %s175, 1
    %p179 = scmp.eq.s32.totalorder %s15, 1
    %p180 = scmp.ne.s32.totalorder %s175, %s177
    %p181 = scmp.eq.s32.totalorder %s15, 0
    %p182 = por %p180, %p181
    %p183 = scmp.ne.s32.totalorder %s175, %s177
    %p184 = scmp.eq.s32.totalorder %s20, 1
    %p185 = por %p183, %p184
    %p186 = scmp.ne.s32.totalorder %s177, %s178
    %p187 = scmp.eq.s32.totalorder %s20, 0
    %p188 = por %p186, %p187
    %p189 = scmp.ne.s32.totalorder %s177, %s178
    %p190 = scmp.eq.s32.totalorder %s21, 1
    %p191 = por %p189, %p190
    %p193 = scmp.ne.s32.totalorder %s178, %s192
    %p194 = scmp.eq.s32.totalorder %s21, 0
    %p195 = por %p193, %p194
    %s197 = sadd.s32 %s196, 1
    %p200 = scmp.eq.s32.totalorder %s15, 1
    %p201 = scmp.ne.s32.totalorder %s196, %s198
    %p202 = scmp.eq.s32.totalorder %s15, 0
    %p203 = por %p201, %p202
    %p204 = scmp.ne.s32.totalorder %s196, %s198
    %p205 = scmp.eq.s32.totalorder %s20, 1
    %p206 = por %p204, %p205
    %p207 = scmp.ne.s32.totalorder %s198, %s199
    %p208 = scmp.eq.s32.totalorder %s20, 0
    %p209 = por %p207, %p208
    %p210 = scmp.ne.s32.totalorder %s198, %s199
    %p211 = scmp.eq.s32.totalorder %s21, 1
    %p212 = por %p210, %p211
    %p214 = scmp.ne.s32.totalorder %s199, %s213
    %p215 = scmp.eq.s32.totalorder %s21, 0
    %p216 = por %p214, %p215
    %s217 = ssub.s32 %s15, %s22
    %p218 = scmp.eq.s32.totalorder %s217, 0
    %s220 = sadd.s32 %s219, 1
    %s221 = scalar_select %p218, %s219, %s220
    %p224 = pneg %p218
    %p225 = scmp.eq.s32.totalorder %s15, 1
    %p226 = por %p224, %p225
    %p227 = scmp.ne.s32.totalorder %s219, %s222
    %p228 = scmp.eq.s32.totalorder %s15, 0
    %p229 = por %p227, %p228
    %p230 = scmp.ne.s32.totalorder %s219, %s222
    %p231 = scmp.eq.s32.totalorder %s20, 1
    %p232 = por %p230, %p231
    %p233 = scmp.ne.s32.totalorder %s222, %s223
    %p234 = scmp.eq.s32.totalorder %s20, 0
    %p235 = por %p233, %p234
    %p236 = scmp.ne.s32.totalorder %s222, %s223
    %p237 = scmp.eq.s32.totalorder %s21, 1
    %p238 = por %p236, %p237
    %p240 = scmp.ne.s32.totalorder %s223, %s239
    %p241 = scmp.eq.s32.totalorder %s21, 0
    %p242 = por %p240, %p241
    %p243 = scmp.le.s32.totalorder 1, %s15
    %p244 = scmp.lt.s32.totalorder %s15, 3
    %p245 = pnand %p243, %p244
    %p246 = pneg %p245
    // Predicated region
    $region9: #{_lambda_.1} parent=5 // pred_check
      _
    $region10: #{_lambda_.1} parent=5 // pred_check_branch
      %248 = sbr.rel (%p245) target = $region12
    $region11: #{_lambda_.1} parent=5 // pred_region
      %s249 = ssub.s32 %s15, 1
      // Predicated region
      $region13: #{_lambda_.1} parent=11 // pred_check
        %p250 = pneg %p62
      $region14: #{_lambda_.1} parent=11 // pred_check_branch
        %252 = sbr.rel (%p250) target = $region16
      $region15: #{_lambda_.1} parent=11 // pred_region
        _
      $region16: #{_lambda_.1} parent=11 // pred_fallthru
        _
      // Predicated region
      $region17: #{_lambda_.1} parent=11 // pred_check
        %p253 = pneg %p83
      $region18: #{_lambda_.1} parent=11 // pred_check_branch
        %255 = sbr.rel (%p253) target = $region20
      $region19: #{_lambda_.1} parent=11 // pred_region
        _
      $region20: #{_lambda_.1} parent=11 // pred_fallthru
        _
      // Predicated region
      $region21: #{_lambda_.1} parent=11 // pred_check
        %p256 = pneg %p104
      $region22: #{_lambda_.1} parent=11 // pred_check_branch
        %258 = sbr.rel (%p256) target = $region24
      $region23: #{_lambda_.1} parent=11 // pred_region
        _
      $region24: #{_lambda_.1} parent=11 // pred_fallthru
        _
      // Predicated region
      $region25: #{_lambda_.1} parent=11 // pred_check
        %p259 = pneg %p125
      $region26: #{_lambda_.1} parent=11 // pred_check_branch
        %261 = sbr.rel (%p259) target = $region28
      $region27: #{_lambda_.1} parent=11 // pred_region
        _
      $region28: #{_lambda_.1} parent=11 // pred_fallthru
        _
      // Predicated region
      $region29: #{_lambda_.1} parent=11 // pred_check
        %p262 = pneg %p146
      $region30: #{_lambda_.1} parent=11 // pred_check_branch
        %264 = sbr.rel (%p262) target = $region32
      $region31: #{_lambda_.1} parent=11 // pred_region
        _
      $region32: #{_lambda_.1} parent=11 // pred_fallthru
        _
      // Predicated region
      $region33: #{_lambda_.1} parent=11 // pred_check
        %p265 = pneg %p167
      $region34: #{_lambda_.1} parent=11 // pred_check_branch
        %267 = sbr.rel (%p265) target = $region36
      $region35: #{_lambda_.1} parent=11 // pred_region
        _
      $region36: #{_lambda_.1} parent=11 // pred_fallthru
        _
      // Predicated region
      $region37: #{_lambda_.1} parent=11 // pred_check
        %p268 = pneg %p188
      $region38: #{_lambda_.1} parent=11 // pred_check_branch
        %270 = sbr.rel (%p268) target = $region40
      $region39: #{_lambda_.1} parent=11 // pred_region
        _
      $region40: #{_lambda_.1} parent=11 // pred_fallthru
        _
      // Predicated region
      $region41: #{_lambda_.1} parent=11 // pred_check
        %p271 = pneg %p209
      $region42: #{_lambda_.1} parent=11 // pred_check_branch
        %273 = sbr.rel (%p271) target = $region44
      $region43: #{_lambda_.1} parent=11 // pred_region
        _
      $region44: #{_lambda_.1} parent=11 // pred_fallthru
        _
    $region12: #{_lambda_.1} parent=5 // pred_fallthru
      _
    %p274 = scmp.lt.s32.totalorder %s15, 2
    // Predicated region
    $region45: #{_lambda_.1} parent=5 // pred_check
      %p275 = pneg %p274
    $region46: #{_lambda_.1} parent=5 // pred_check_branch
      %277 = sbr.rel (%p275) target = $region48
    $region47: #{_lambda_.1} parent=5 // pred_region
      // Predicated region
      $region49: #{_lambda_.1} parent=47 // pred_check
        %p278 = pneg %p35
      $region50: #{_lambda_.1} parent=47 // pred_check_branch
        %280 = sbr.rel (%p278) target = $region52
      $region51: #{_lambda_.1} parent=47 // pred_region
        %s281 = smul.u32 16, %s15
        %p282 = scmp.lt.s32.totalorder %s281, 31
        %s283 = scalar_select %p282, %s281, 31
        %s284 = smul.addr %s283, 4
        %s285 = scalar_lea.vmem %s0, %s284
        %s286 = smul.u32 16, %s15
      $region52: #{_lambda_.1} parent=47 // pred_fallthru
        _
    $region48: #{_lambda_.1} parent=5 // pred_fallthru
      _
    %p287 = scmp.le.s32.totalorder 1, %s15
    %p288 = scmp.lt.s32.totalorder %s15, 3
    %p289 = pnand %p287, %p288
    %p290 = pneg %p289
    // Predicated region
    $region53: #{_lambda_.1} parent=5 // pred_check
      _
    $region54: #{_lambda_.1} parent=5 // pred_check_branch
      %292 = sbr.rel (%p289) target = $region56
    $region55: #{_lambda_.1} parent=5 // pred_region
      %s293 = ssub.s32 %s15, 1
      %s294 = smul.u32 16, %s20
      %p295 = scmp.lt.s32.totalorder %s294, 31
      %s296 = scalar_select %p295, %s294, 31
      %s297 = smul.addr %s296, 4
      %s298 = scalar_lea.vmem %s0, %s297
      %p299 = pneg %p41
      %p300 = pneg %p38
      %p301 = pneg %p62
      %p302 = pneg %p59
      %p303 = pneg %p83
      %p304 = pneg %p80
      %p305 = pneg %p104
      %p306 = pneg %p101
      %p307 = pneg %p125
      %p308 = pneg %p122
      %p309 = pneg %p146
      %p310 = pneg %p143
      %p311 = pneg %p167
      %p312 = pneg %p164
      %p313 = pneg %p188
      %p314 = pneg %p185
      %p315 = pneg %p209
      %p316 = pneg %p206
      %p317 = pneg %p235
      %p318 = pneg %p232
      %s319 = smul.u32 16, %s20
      %p320 = scmp.lt.s32.totalorder %s319, 31
      %s321 = scalar_select %p320, %s319, 31
      %s322 = smul.addr %s321, 4
      %s323 = scalar_lea.vmem %s9, %s322
      %s324 = smul.u32 16, %s20
      %p325 = scmp.lt.s32.totalorder %s324, 31
      %s326 = scalar_select %p325, %s324, 31
      %s327 = smul.addr %s326, 4
      %s328 = scalar_lea.vmem %s0, %s327
      %s329 = smul.u32 16, %s20
      %s330 = smul.u32 16, %s20
      %p331 = scmp.lt.s32.totalorder %s330, 31
      %s332 = scalar_select %p331, %s330, 31
      %s333 = smul.addr %s332, 4
      %s334 = scalar_lea.vmem %s9, %s333
      %s335 = smul.u32 16, %s20
      %v337 = vld [vmem:[%s328] sm:$0xf]
      %v338 = vld [vmem:[%s328 + $0x4] sm:$0xf]
      %v339 = vld [vmem:[%s328 + $0x8] sm:$0xf]
      %v340 = vld [vmem:[%s328 + $0xc] sm:$0xf]
      %v341 = vld [vmem:[%s328 + $0x10] sm:$0xf]
      %v342 = vld [vmem:[%s328 + $0x14] sm:$0xf]
      %v343 = vld [vmem:[%s328 + $0x18] sm:$0xf]
      %v344 = vld [vmem:[%s328 + $0x1c] sm:$0xf]
      %v345 = vld [vmem:[%s328 + $0x20] sm:$0xf]
      %v346 = vld [vmem:[%s328 + $0x24] sm:$0xf]
      %v347 = vld [vmem:[%s328 + $0x28] sm:$0xf]
      %v348 = vld [vmem:[%s328 + $0x2c] sm:$0xf]
      %v349 = vld [vmem:[%s328 + $0x30] sm:$0xf]
      %v350 = vld [vmem:[%s328 + $0x34] sm:$0xf]
      %v351 = vld [vmem:[%s328 + $0x38] sm:$0xf]
      %v352 = vld [vmem:[%s328 + $0x3c] sm:$0xf]
      %v353 = vld [vmem:[%s1] sm:$0xf]
      %v354 = vld [vmem:[%s1 + $0x4] sm:$0xf]
      %v355 = vld [vmem:[%s1 + $0x8] sm:$0xf]
      %v356 = vld [vmem:[%s1 + $0xc] sm:$0xf]
      %v357 = vld [vmem:[%s1 + $0x10] sm:$0xf]
      %v358 = vld [vmem:[%s1 + $0x14] sm:$0xf]
      %v359 = vld [vmem:[%s1 + $0x18] sm:$0xf]
      %v360 = vld [vmem:[%s1 + $0x1c] sm:$0xf]
      %v361 = vld [vmem:[%s1 + $0x20] sm:$0xf]
      %v362 = vld [vmem:[%s1 + $0x24] sm:$0xf]
      %v363 = vld [vmem:[%s1 + $0x28] sm:$0xf]
      %v364 = vld [vmem:[%s1 + $0x2c] sm:$0xf]
      %v365 = vld [vmem:[%s1 + $0x30] sm:$0xf]
      %v366 = vld [vmem:[%s1 + $0x34] sm:$0xf]
      %v367 = vld [vmem:[%s1 + $0x38] sm:$0xf]
      %v368 = vld [vmem:[%s1 + $0x3c] sm:$0xf]
      %v369 = vld [vmem:[%s2] sm:$0x1]
      %v371 = vlaneseq
      %v372 = vshrl.u32 %v371, 7
      %v373 = vsub.s32 0, %v372
      %v374 = vrot.slane %v369, %v373
      %v392 = vunpack.c.l.b16 %v337
      %v393 = vunpack.c.l.b16 %v338
      %v394 = vunpack.c.l.b16 %v339
      %v395 = vunpack.c.l.b16 %v340
      %v396 = vunpack.c.l.b16 %v341
      %v397 = vunpack.c.l.b16 %v342
      %v398 = vunpack.c.l.b16 %v343
      %v399 = vunpack.c.l.b16 %v344
      %v400 = vunpack.c.l.b16 %v345
      %v401 = vunpack.c.l.b16 %v346
      %v402 = vunpack.c.l.b16 %v347
      %v403 = vunpack.c.l.b16 %v348
      %v404 = vunpack.c.l.b16 %v349
      %v405 = vunpack.c.l.b16 %v350
      %v406 = vunpack.c.l.b16 %v351
      %v407 = vunpack.c.l.b16 %v352
      %v408 = vpack.c.b16 %v393, %v392
      %v409 = vpack.c.b16 %v395, %v394
      %v410 = vpack.c.b16 %v397, %v396
      %v411 = vpack.c.b16 %v399, %v398
      %v412 = vpack.c.b16 %v401, %v400
      %v413 = vpack.c.b16 %v403, %v402
      %v414 = vpack.c.b16 %v405, %v404
      %v415 = vpack.c.b16 %v407, %v406
      %v440 = vunpack.c.l.b16 %v353
      %v441 = vunpack.c.l.b16 %v354
      %v442 = vunpack.c.l.b16 %v355
      %v443 = vunpack.c.l.b16 %v356
      %v444 = vunpack.c.l.b16 %v357
      %v445 = vunpack.c.l.b16 %v358
      %v446 = vunpack.c.l.b16 %v359
      %v447 = vunpack.c.l.b16 %v360
      %v448 = vunpack.c.l.b16 %v361
      %v449 = vunpack.c.l.b16 %v362
      %v450 = vunpack.c.l.b16 %v363
      %v451 = vunpack.c.l.b16 %v364
      %v452 = vunpack.c.l.b16 %v365
      %v453 = vunpack.c.l.b16 %v366
      %v454 = vunpack.c.l.b16 %v367
      %v455 = vunpack.c.l.b16 %v368
      %v456 = vpack.c.b16 %v441, %v440
      %v457 = vpack.c.b16 %v443, %v442
      %v458 = vpack.c.b16 %v445, %v444
      %v459 = vpack.c.b16 %v447, %v446
      %v460 = vpack.c.b16 %v449, %v448
      %v461 = vpack.c.b16 %v451, %v450
      %v462 = vpack.c.b16 %v453, %v452
      %v463 = vpack.c.b16 %v455, %v454
      %472 = vmatprep.subr.bf16.mxu0 0
      %473 = vmatpush1.bf16.msra.mxu0 %v456
      %474 = vmatprep.subr.bf16.mxu0 0
      %475 = vmatpush1.bf16.msra.mxu0 %v457
      %476 = vmatprep.subr.bf16.mxu0 0
      %477 = vmatpush1.bf16.msra.mxu0 %v458
      %478 = vmatprep.subr.bf16.mxu0 0
      %479 = vmatpush1.bf16.msra.mxu0 %v459
      %480 = vmatprep.subr.bf16.mxu0 0
      %481 = vmatpush1.bf16.msra.mxu0 %v460
      %482 = vmatprep.subr.bf16.mxu0 0
      %483 = vmatpush1.bf16.msra.mxu0 %v461
      %484 = vmatprep.subr.bf16.mxu0 0
      %485 = vmatpush1.bf16.msra.mxu0 %v462
      %486 = vmatprep.subr.bf16.mxu0 0
      %487 = vmatpush1.bf16.msra.mxu0 %v463
      %488 = vmatprep.subr.bf16.mxu0 0
      %489 = vmatpush1.bf16.msra.mxu0 0
      %490 = vmatprep.subr.bf16.mxu0 0
      %491 = vmatpush1.bf16.msra.mxu0 0
      %492 = vmatprep.subr.bf16.mxu0 0
      %493 = vmatpush1.bf16.msra.mxu0 0
      %494 = vmatprep.subr.bf16.mxu0 0
      %495 = vmatpush1.bf16.msra.mxu0 0
      %496 = vmatprep.subr.bf16.mxu0 0
      %497 = vmatpush1.bf16.msra.mxu0 0
      %498 = vmatprep.subr.bf16.mxu0 0
      %499 = vmatpush1.bf16.msra.mxu0 0
      %500 = vmatprep.subr.bf16.mxu0 0
      %501 = vmatpush1.bf16.msra.mxu0 0
      %502 = vmatprep.subr.bf16.mxu0 0
      %503 = vmatpush1.bf16.msra.mxu0 0
      %504 = vmatprep.mubr.bf16.mxu0 0
      %505 = vmatmul.mubr.bf16.gmra.mrb[0].mxu0 %v408
      %v506 = vpop.f32.mrb[0].mxu0
      %v507 = vadd.f32 %v374, %v506
      %v508 = vpop.f32.mrb[0].mxu0
      %v509 = vpop.f32.mrb[0].mxu0
      %v510 = vadd.f32 %v374, %v509
      %v511 = vpop.f32.mrb[0].mxu0
      %512 = vmatprep.mubr.bf16.mxu0 0
      %513 = vmatmul.mubr.bf16.gmra.mrb[0].mxu0 %v409
      %v514 = vpop.f32.mrb[0].mxu0
      %v515 = vadd.f32 %v374, %v514
      %v516 = vpop.f32.mrb[0].mxu0
      %v517 = vpop.f32.mrb[0].mxu0
      %v518 = vadd.f32 %v374, %v517
      %v519 = vpop.f32.mrb[0].mxu0
      %520 = vmatprep.mubr.bf16.mxu0 0
      %521 = vmatmul.mubr.bf16.gmra.mrb[0].mxu0 %v410
      %v522 = vpop.f32.mrb[0].mxu0
      %v523 = vadd.f32 %v374, %v522
      %v524 = vpop.f32.mrb[0].mxu0
      %v525 = vpop.f32.mrb[0].mxu0
      %v526 = vadd.f32 %v374, %v525
      %v527 = vpop.f32.mrb[0].mxu0
      %528 = vmatprep.mubr.bf16.mxu0 0
      %529 = vmatmul.mubr.bf16.gmra.mrb[0].mxu0 %v411
      %v530 = vpop.f32.mrb[0].mxu0
      %v531 = vadd.f32 %v374, %v530
      %v532 = vpop.f32.mrb[0].mxu0
      %v533 = vpop.f32.mrb[0].mxu0
      %v534 = vadd.f32 %v374, %v533
      %v535 = vpop.f32.mrb[0].mxu0
      %536 = vmatprep.mubr.bf16.mxu0 0
      %537 = vmatmul.mubr.bf16.gmra.mrb[0].mxu0 %v412
      %v538 = vpop.f32.mrb[0].mxu0
      %v539 = vadd.f32 %v374, %v538
      %v540 = vpop.f32.mrb[0].mxu0
      %v541 = vpop.f32.mrb[0].mxu0
      %v542 = vadd.f32 %v374, %v541
      %v543 = vpop.f32.mrb[0].mxu0
      %544 = vmatprep.mubr.bf16.mxu0 0
      %545 = vmatmul.mubr.bf16.gmra.mrb[0].mxu0 %v413
      %v546 = vpop.f32.mrb[0].mxu0
      %v547 = vadd.f32 %v374, %v546
      %v548 = vpop.f32.mrb[0].mxu0
      %v549 = vpop.f32.mrb[0].mxu0
      %v550 = vadd.f32 %v374, %v549
      %v551 = vpop.f32.mrb[0].mxu0
      %552 = vmatprep.mubr.bf16.mxu0 0
      %553 = vmatmul.mubr.bf16.gmra.mrb[0].mxu0 %v414
      %v554 = vpop.f32.mrb[0].mxu0
      %v555 = vadd.f32 %v374, %v554
      %v556 = vpop.f32.mrb[0].mxu0
      %v557 = vpop.f32.mrb[0].mxu0
      %v558 = vadd.f32 %v374, %v557
      %v559 = vpop.f32.mrb[0].mxu0
      %560 = vmatprep.mubr.bf16.mxu0 0
      %561 = vmatmul.mubr.bf16.gmra.mrb[0].mxu0 %v415
      %v562 = vpop.f32.mrb[0].mxu0
      %v563 = vadd.f32 %v374, %v562
      %v564 = vpop.f32.mrb[0].mxu0
      %v565 = vpop.f32.mrb[0].mxu0
      %v566 = vadd.f32 %v374, %v565
      %v567 = vpop.f32.mrb[0].mxu0
      %568 = vdwg.mxu0
      %v569 = vmax.f32 %v507, 0.0
      %v570 = vmax.f32 %v510, 0.0
      %v571 = vmax.f32 %v515, 0.0
      %v572 = vmax.f32 %v518, 0.0
      %v573 = vmax.f32 %v523, 0.0
      %v574 = vmax.f32 %v526, 0.0
      %v575 = vmax.f32 %v531, 0.0
      %v576 = vmax.f32 %v534, 0.0
      %v577 = vmax.f32 %v539, 0.0
      %v578 = vmax.f32 %v542, 0.0
      %v579 = vmax.f32 %v547, 0.0
      %v580 = vmax.f32 %v550, 0.0
      %v581 = vmax.f32 %v555, 0.0
      %v582 = vmax.f32 %v558, 0.0
      %v583 = vmax.f32 %v563, 0.0
      %v584 = vmax.f32 %v566, 0.0
      %v585 = vpack.c.bf16 %v570, %v569
      %v586 = vpack.c.bf16 %v572, %v571
      %v587 = vpack.c.bf16 %v574, %v573
      %v588 = vpack.c.bf16 %v576, %v575
      %v589 = vpack.c.bf16 %v578, %v577
      %v590 = vpack.c.bf16 %v580, %v579
      %v591 = vpack.c.bf16 %v582, %v581
      %v592 = vpack.c.bf16 %v584, %v583
      %v593 = vld [vmem:[%s3] sm:$0xf]
      %v594 = vld [vmem:[%s3 + $0x4] sm:$0xf]
      %v595 = vld [vmem:[%s3 + $0x8] sm:$0xf]
      %v596 = vld [vmem:[%s3 + $0xc] sm:$0xf]
      %v597 = vld [vmem:[%s3 + $0x10] sm:$0xf]
      %v598 = vld [vmem:[%s3 + $0x14] sm:$0xf]
      %v599 = vld [vmem:[%s3 + $0x18] sm:$0xf]
      %v600 = vld [vmem:[%s3 + $0x1c] sm:$0xf]
      %v601 = vld [vmem:[%s3 + $0x20] sm:$0xf]
      %v602 = vld [vmem:[%s3 + $0x24] sm:$0xf]
      %v603 = vld [vmem:[%s3 + $0x28] sm:$0xf]
      %v604 = vld [vmem:[%s3 + $0x2c] sm:$0xf]
      %v605 = vld [vmem:[%s3 + $0x30] sm:$0xf]
      %v606 = vld [vmem:[%s3 + $0x34] sm:$0xf]
      %v607 = vld [vmem:[%s3 + $0x38] sm:$0xf]
      %v608 = vld [vmem:[%s3 + $0x3c] sm:$0xf]
      %v609 = vld [vmem:[%s4] sm:$0x1]
      %v611 = vlaneseq
      %v612 = vshrl.u32 %v611, 7
      %v613 = vsub.s32 0, %v612
      %v614 = vrot.slane %v609, %v613
      %v632 = vunpack.c.l.b16 %v593
      %v633 = vunpack.c.l.b16 %v594
      %v634 = vunpack.c.l.b16 %v595
      %v635 = vunpack.c.l.b16 %v596
      %v636 = vunpack.c.l.b16 %v597
      %v637 = vunpack.c.l.b16 %v598
      %v638 = vunpack.c.l.b16 %v599
      %v639 = vunpack.c.l.b16 %v600
      %v640 = vunpack.c.l.b16 %v601
      %v641 = vunpack.c.l.b16 %v602
      %v642 = vunpack.c.l.b16 %v603
      %v643 = vunpack.c.l.b16 %v604
      %v644 = vunpack.c.l.b16 %v605
      %v645 = vunpack.c.l.b16 %v606
      %v646 = vunpack.c.l.b16 %v607
      %v647 = vunpack.c.l.b16 %v608
      %v648 = vpack.c.b16 %v633, %v632
      %v649 = vpack.c.b16 %v635, %v634
      %v650 = vpack.c.b16 %v637, %v636
      %v651 = vpack.c.b16 %v639, %v638
      %v652 = vpack.c.b16 %v641, %v640
      %v653 = vpack.c.b16 %v643, %v642
      %v654 = vpack.c.b16 %v645, %v644
      %v655 = vpack.c.b16 %v647, %v646
      %664 = vmatprep.subr.bf16.mxu0 0
      %665 = vmatpush1.bf16.msra.mxu0 %v648
      %666 = vmatprep.subr.bf16.mxu0 0
      %667 = vmatpush1.bf16.msra.mxu0 %v649
      %668 = vmatprep.subr.bf16.mxu0 0
      %669 = vmatpush1.bf16.msra.mxu0 %v650
      %670 = vmatprep.subr.bf16.mxu0 0
      %671 = vmatpush1.bf16.msra.mxu0 %v651
      %672 = vmatprep.subr.bf16.mxu0 0
      %673 = vmatpush1.bf16.msra.mxu0 %v652
      %674 = vmatprep.subr.bf16.mxu0 0
      %675 = vmatpush1.bf16.msra.mxu0 %v653
      %676 = vmatprep.subr.bf16.mxu0 0
      %677 = vmatpush1.bf16.msra.mxu0 %v654
      %678 = vmatprep.subr.bf16.mxu0 0
      %679 = vmatpush1.bf16.msra.mxu0 %v655
      %680 = vmatprep.subr.bf16.mxu0 0
      %681 = vmatpush1.bf16.msra.mxu0 0
      %682 = vmatprep.subr.bf16.mxu0 0
      %683 = vmatpush1.bf16.msra.mxu0 0
      %684 = vmatprep.subr.bf16.mxu0 0
      %685 = vmatpush1.bf16.msra.mxu0 0
      %686 = vmatprep.subr.bf16.mxu0 0
      %687 = vmatpush1.bf16.msra.mxu0 0
      %688 = vmatprep.subr.bf16.mxu0 0
      %689 = vmatpush1.bf16.msra.mxu0 0
      %690 = vmatprep.subr.bf16.mxu0 0
      %691 = vmatpush1.bf16.msra.mxu0 0
      %692 = vmatprep.subr.bf16.mxu0 0
      %693 = vmatpush1.bf16.msra.mxu0 0
      %694 = vmatprep.subr.bf16.mxu0 0
      %695 = vmatpush1.bf16.msra.mxu0 0
      %696 = vmatprep.mubr.bf16.mxu0 0
      %697 = vmatmul.mubr.bf16.gmra.mrb[0].mxu0 %v585
      %v698 = vpop.f32.mrb[0].mxu0
      %v699 = vadd.f32 %v614, %v698
      %v700 = vpop.f32.mrb[0].mxu0
      %v701 = vpop.f32.mrb[0].mxu0
      %v702 = vadd.f32 %v614, %v701
      %v703 = vpop.f32.mrb[0].mxu0
      %704 = vmatprep.mubr.bf16.mxu0 0
      %705 = vmatmul.mubr.bf16.gmra.mrb[0].mxu0 %v586
      %v706 = vpop.f32.mrb[0].mxu0
      %v707 = vadd.f32 %v614, %v706
      %v708 = vpop.f32.mrb[0].mxu0
      %v709 = vpop.f32.mrb[0].mxu0
      %v710 = vadd.f32 %v614, %v709
      %v711 = vpop.f32.mrb[0].mxu0
      %712 = vmatprep.mubr.bf16.mxu0 0
      %713 = vmatmul.mubr.bf16.gmra.mrb[0].mxu0 %v587
      %v714 = vpop.f32.mrb[0].mxu0
      %v715 = vadd.f32 %v614, %v714
      %v716 = vpop.f32.mrb[0].mxu0
      %v717 = vpop.f32.mrb[0].mxu0
      %v718 = vadd.f32 %v614, %v717
      %v719 = vpop.f32.mrb[0].mxu0
      %720 = vmatprep.mubr.bf16.mxu0 0
      %721 = vmatmul.mubr.bf16.gmra.mrb[0].mxu0 %v588
      %v722 = vpop.f32.mrb[0].mxu0
      %v723 = vadd.f32 %v614, %v722
      %v724 = vpop.f32.mrb[0].mxu0
      %v725 = vpop.f32.mrb[0].mxu0
      %v726 = vadd.f32 %v614, %v725
      %v727 = vpop.f32.mrb[0].mxu0
      %728 = vmatprep.mubr.bf16.mxu0 0
      %729 = vmatmul.mubr.bf16.gmra.mrb[0].mxu0 %v589
      %v730 = vpop.f32.mrb[0].mxu0
      %v731 = vadd.f32 %v614, %v730
      %v732 = vpop.f32.mrb[0].mxu0
      %v733 = vpop.f32.mrb[0].mxu0
      %v734 = vadd.f32 %v614, %v733
      %v735 = vpop.f32.mrb[0].mxu0
      %736 = vmatprep.mubr.bf16.mxu0 0
      %737 = vmatmul.mubr.bf16.gmra.mrb[0].mxu0 %v590
      %v738 = vpop.f32.mrb[0].mxu0
      %v739 = vadd.f32 %v614, %v738
      %v740 = vpop.f32.mrb[0].mxu0
      %v741 = vpop.f32.mrb[0].mxu0
      %v742 = vadd.f32 %v614, %v741
      %v743 = vpop.f32.mrb[0].mxu0
      %744 = vmatprep.mubr.bf16.mxu0 0
      %745 = vmatmul.mubr.bf16.gmra.mrb[0].mxu0 %v591
      %v746 = vpop.f32.mrb[0].mxu0
      %v747 = vadd.f32 %v614, %v746
      %v748 = vpop.f32.mrb[0].mxu0
      %v749 = vpop.f32.mrb[0].mxu0
      %v750 = vadd.f32 %v614, %v749
      %v751 = vpop.f32.mrb[0].mxu0
      %752 = vmatprep.mubr.bf16.mxu0 0
      %753 = vmatmul.mubr.bf16.gmra.mrb[0].mxu0 %v592
      %v754 = vpop.f32.mrb[0].mxu0
      %v755 = vadd.f32 %v614, %v754
      %v756 = vpop.f32.mrb[0].mxu0
      %v757 = vpop.f32.mrb[0].mxu0
      %v758 = vadd.f32 %v614, %v757
      %v759 = vpop.f32.mrb[0].mxu0
      %760 = vdwg.mxu0
      %v761 = vmax.f32 %v699, 0.0
      %v762 = vmax.f32 %v702, 0.0
      %v763 = vmax.f32 %v707, 0.0
      %v764 = vmax.f32 %v710, 0.0
      %v765 = vmax.f32 %v715, 0.0
      %v766 = vmax.f32 %v718, 0.0
      %v767 = vmax.f32 %v723, 0.0
      %v768 = vmax.f32 %v726, 0.0
      %v769 = vmax.f32 %v731, 0.0
      %v770 = vmax.f32 %v734, 0.0
      %v771 = vmax.f32 %v739, 0.0
      %v772 = vmax.f32 %v742, 0.0
      %v773 = vmax.f32 %v747, 0.0
      %v774 = vmax.f32 %v750, 0.0
      %v775 = vmax.f32 %v755, 0.0
      %v776 = vmax.f32 %v758, 0.0
      %v777 = vpack.c.bf16 %v762, %v761
      %v778 = vpack.c.bf16 %v764, %v763
      %v779 = vpack.c.bf16 %v766, %v765
      %v780 = vpack.c.bf16 %v768, %v767
      %v781 = vpack.c.bf16 %v770, %v769
      %v782 = vpack.c.bf16 %v772, %v771
      %v783 = vpack.c.bf16 %v774, %v773
      %v784 = vpack.c.bf16 %v776, %v775
      %v785 = vld [vmem:[%s5] sm:$0xf]
      %v786 = vld [vmem:[%s5 + $0x4] sm:$0xf]
      %v787 = vld [vmem:[%s5 + $0x8] sm:$0xf]
      %v788 = vld [vmem:[%s5 + $0xc] sm:$0xf]
      %v789 = vld [vmem:[%s5 + $0x10] sm:$0xf]
      %v790 = vld [vmem:[%s5 + $0x14] sm:$0xf]
      %v791 = vld [vmem:[%s5 + $0x18] sm:$0xf]
      %v792 = vld [vmem:[%s5 + $0x1c] sm:$0xf]
      %v793 = vld [vmem:[%s5 + $0x20] sm:$0xf]
      %v794 = vld [vmem:[%s5 + $0x24] sm:$0xf]
      %v795 = vld [vmem:[%s5 + $0x28] sm:$0xf]
      %v796 = vld [vmem:[%s5 + $0x2c] sm:$0xf]
      %v797 = vld [vmem:[%s5 + $0x30] sm:$0xf]
      %v798 = vld [vmem:[%s5 + $0x34] sm:$0xf]
      %v799 = vld [vmem:[%s5 + $0x38] sm:$0xf]
      %v800 = vld [vmem:[%s5 + $0x3c] sm:$0xf]
      %v801 = vld [vmem:[%s6] sm:$0x1]
      %v803 = vlaneseq
      %v804 = vshrl.u32 %v803, 7
      %v805 = vsub.s32 0, %v804
      %v806 = vrot.slane %v801, %v805
      %v824 = vunpack.c.l.b16 %v785
      %v825 = vunpack.c.l.b16 %v786
      %v826 = vunpack.c.l.b16 %v787
      %v827 = vunpack.c.l.b16 %v788
      %v828 = vunpack.c.l.b16 %v789
      %v829 = vunpack.c.l.b16 %v790
      %v830 = vunpack.c.l.b16 %v791
      %v831 = vunpack.c.l.b16 %v792
      %v832 = vunpack.c.l.b16 %v793
      %v833 = vunpack.c.l.b16 %v794
      %v834 = vunpack.c.l.b16 %v795
      %v835 = vunpack.c.l.b16 %v796
      %v836 = vunpack.c.l.b16 %v797
      %v837 = vunpack.c.l.b16 %v798
      %v838 = vunpack.c.l.b16 %v799
      %v839 = vunpack.c.l.b16 %v800
      %v840 = vpack.c.b16 %v825, %v824
      %v841 = vpack.c.b16 %v827, %v826
      %v842 = vpack.c.b16 %v829, %v828
      %v843 = vpack.c.b16 %v831, %v830
      %v844 = vpack.c.b16 %v833, %v832
      %v845 = vpack.c.b16 %v835, %v834
      %v846 = vpack.c.b16 %v837, %v836
      %v847 = vpack.c.b16 %v839, %v838
      %856 = vmatprep.subr.bf16.mxu0 0
      %857 = vmatpush1.bf16.msra.mxu0 %v840
      %858 = vmatprep.subr.bf16.mxu0 0
      %859 = vmatpush1.bf16.msra.mxu0 %v841
      %860 = vmatprep.subr.bf16.mxu0 0
      %861 = vmatpush1.bf16.msra.mxu0 %v842
      %862 = vmatprep.subr.bf16.mxu0 0
      %863 = vmatpush1.bf16.msra.mxu0 %v843
      %864 = vmatprep.subr.bf16.mxu0 0
      %865 = vmatpush1.bf16.msra.mxu0 %v844
      %866 = vmatprep.subr.bf16.mxu0 0
      %867 = vmatpush1.bf16.msra.mxu0 %v845
      %868 = vmatprep.subr.bf16.mxu0 0
      %869 = vmatpush1.bf16.msra.mxu0 %v846
      %870 = vmatprep.subr.bf16.mxu0 0
      %871 = vmatpush1.bf16.msra.mxu0 %v847
      %872 = vmatprep.subr.bf16.mxu0 0
      %873 = vmatpush1.bf16.msra.mxu0 0
      %874 = vmatprep.subr.bf16.mxu0 0
      %875 = vmatpush1.bf16.msra.mxu0 0
      %876 = vmatprep.subr.bf16.mxu0 0
      %877 = vmatpush1.bf16.msra.mxu0 0
      %878 = vmatprep.subr.bf16.mxu0 0
      %879 = vmatpush1.bf16.msra.mxu0 0
      %880 = vmatprep.subr.bf16.mxu0 0
      %881 = vmatpush1.bf16.msra.mxu0 0
      %882 = vmatprep.subr.bf16.mxu0 0
      %883 = vmatpush1.bf16.msra.mxu0 0
      %884 = vmatprep.subr.bf16.mxu0 0
      %885 = vmatpush1.bf16.msra.mxu0 0
      %886 = vmatprep.subr.bf16.mxu0 0
      %887 = vmatpush1.bf16.msra.mxu0 0
      %888 = vmatprep.mubr.bf16.mxu0 0
      %889 = vmatmul.mubr.bf16.gmra.mrb[0].mxu0 %v777
      %v890 = vpop.f32.mrb[0].mxu0
      %v891 = vadd.f32 %v806, %v890
      %v892 = vpop.f32.mrb[0].mxu0
      %v893 = vpop.f32.mrb[0].mxu0
      %v894 = vadd.f32 %v806, %v893
      %v895 = vpop.f32.mrb[0].mxu0
      %896 = vmatprep.mubr.bf16.mxu0 0
      %897 = vmatmul.mubr.bf16.gmra.mrb[0].mxu0 %v778
      %v898 = vpop.f32.mrb[0].mxu0
      %v899 = vadd.f32 %v806, %v898
      %v900 = vpop.f32.mrb[0].mxu0
      %v901 = vpop.f32.mrb[0].mxu0
      %v902 = vadd.f32 %v806, %v901
      %v903 = vpop.f32.mrb[0].mxu0
      %904 = vmatprep.mubr.bf16.mxu0 0
      %905 = vmatmul.mubr.bf16.gmra.mrb[0].mxu0 %v779
      %v906 = vpop.f32.mrb[0].mxu0
      %v907 = vadd.f32 %v806, %v906
      %v908 = vpop.f32.mrb[0].mxu0
      %v909 = vpop.f32.mrb[0].mxu0
      %v910 = vadd.f32 %v806, %v909
      %v911 = vpop.f32.mrb[0].mxu0
      %912 = vmatprep.mubr.bf16.mxu0 0
      %913 = vmatmul.mubr.bf16.gmra.mrb[0].mxu0 %v780
      %v914 = vpop.f32.mrb[0].mxu0
      %v915 = vadd.f32 %v806, %v914
      %v916 = vpop.f32.mrb[0].mxu0
      %v917 = vpop.f32.mrb[0].mxu0
      %v918 = vadd.f32 %v806, %v917
      %v919 = vpop.f32.mrb[0].mxu0
      %920 = vmatprep.mubr.bf16.mxu0 0
      %921 = vmatmul.mubr.bf16.gmra.mrb[0].mxu0 %v781
      %v922 = vpop.f32.mrb[0].mxu0
      %v923 = vadd.f32 %v806, %v922
      %v924 = vpop.f32.mrb[0].mxu0
      %v925 = vpop.f32.mrb[0].mxu0
      %v926 = vadd.f32 %v806, %v925
      %v927 = vpop.f32.mrb[0].mxu0
      %928 = vmatprep.mubr.bf16.mxu0 0
      %929 = vmatmul.mubr.bf16.gmra.mrb[0].mxu0 %v782
      %v930 = vpop.f32.mrb[0].mxu0
      %v931 = vadd.f32 %v806, %v930
      %v932 = vpop.f32.mrb[0].mxu0
      %v933 = vpop.f32.mrb[0].mxu0
      %v934 = vadd.f32 %v806, %v933
      %v935 = vpop.f32.mrb[0].mxu0
      %936 = vmatprep.mubr.bf16.mxu0 0
      %937 = vmatmul.mubr.bf16.gmra.mrb[0].mxu0 %v783
      %v938 = vpop.f32.mrb[0].mxu0
      %v939 = vadd.f32 %v806, %v938
      %v940 = vpop.f32.mrb[0].mxu0
      %v941 = vpop.f32.mrb[0].mxu0
      %v942 = vadd.f32 %v806, %v941
      %v943 = vpop.f32.mrb[0].mxu0
      %944 = vmatprep.mubr.bf16.mxu0 0
      %945 = vmatmul.mubr.bf16.gmra.mrb[0].mxu0 %v784
      %v946 = vpop.f32.mrb[0].mxu0
      %v947 = vadd.f32 %v806, %v946
      %v948 = vpop.f32.mrb[0].mxu0
      %v949 = vpop.f32.mrb[0].mxu0
      %v950 = vadd.f32 %v806, %v949
      %v951 = vpop.f32.mrb[0].mxu0
      %952 = vdwg.mxu0
      %v953 = vadd.f32 %v891, %v569
      %v954 = vadd.f32 %v894, %v570
      %v955 = vadd.f32 %v899, %v571
      %v956 = vadd.f32 %v902, %v572
      %v957 = vadd.f32 %v907, %v573
      %v958 = vadd.f32 %v910, %v574
      %v959 = vadd.f32 %v915, %v575
      %v960 = vadd.f32 %v918, %v576
      %v961 = vadd.f32 %v923, %v577
      %v962 = vadd.f32 %v926, %v578
      %v963 = vadd.f32 %v931, %v579
      %v964 = vadd.f32 %v934, %v580
      %v965 = vadd.f32 %v939, %v581
      %v966 = vadd.f32 %v942, %v582
      %v967 = vadd.f32 %v947, %v583
      %v968 = vadd.f32 %v950, %v584
      %v969 = vmax.f32 %v953, 0.0
      %v970 = vmax.f32 %v954, 0.0
      %v971 = vmax.f32 %v955, 0.0
      %v972 = vmax.f32 %v956, 0.0
      %v973 = vmax.f32 %v957, 0.0
      %v974 = vmax.f32 %v958, 0.0
      %v975 = vmax.f32 %v959, 0.0
      %v976 = vmax.f32 %v960, 0.0
      %v977 = vmax.f32 %v961, 0.0
      %v978 = vmax.f32 %v962, 0.0
      %v979 = vmax.f32 %v963, 0.0
      %v980 = vmax.f32 %v964, 0.0
      %v981 = vmax.f32 %v965, 0.0
      %v982 = vmax.f32 %v966, 0.0
      %v983 = vmax.f32 %v967, 0.0
      %v984 = vmax.f32 %v968, 0.0
      %v985 = vpack.c.bf16 %v970, %v969
      %v986 = vpack.c.bf16 %v972, %v971
      %v987 = vpack.c.bf16 %v974, %v973
      %v988 = vpack.c.bf16 %v976, %v975
      %v989 = vpack.c.bf16 %v978, %v977
      %v990 = vpack.c.bf16 %v980, %v979
      %v991 = vpack.c.bf16 %v982, %v981
      %v992 = vpack.c.bf16 %v984, %v983
      %s993 = scalar_lea.vmem %s3, 64
      %v994 = vld [vmem:[%s993] sm:$0xf]
      %v995 = vld [vmem:[%s993 + $0x4] sm:$0xf]
      %v996 = vld [vmem:[%s993 + $0x8] sm:$0xf]
      %v997 = vld [vmem:[%s993 + $0xc] sm:$0xf]
      %v998 = vld [vmem:[%s993 + $0x10] sm:$0xf]
      %v999 = vld [vmem:[%s993 + $0x14] sm:$0xf]
      %v1000 = vld [vmem:[%s993 + $0x18] sm:$0xf]
      %v1001 = vld [vmem:[%s993 + $0x1c] sm:$0xf]
      %v1002 = vld [vmem:[%s993 + $0x20] sm:$0xf]
      %v1003 = vld [vmem:[%s993 + $0x24] sm:$0xf]
      %v1004 = vld [vmem:[%s993 + $0x28] sm:$0xf]
      %v1005 = vld [vmem:[%s993 + $0x2c] sm:$0xf]
      %v1006 = vld [vmem:[%s993 + $0x30] sm:$0xf]
      %v1007 = vld [vmem:[%s993 + $0x34] sm:$0xf]
      %v1008 = vld [vmem:[%s993 + $0x38] sm:$0xf]
      %v1009 = vld [vmem:[%s993 + $0x3c] sm:$0xf]
      %s1010 = scalar_lea.vmem %s4, 1
      %v1011 = vld [vmem:[%s1010] sm:$0x1]
      %v1013 = vlaneseq
      %v1014 = vshrl.u32 %v1013, 7
      %v1015 = vsub.s32 0, %v1014
      %v1016 = vrot.slane %v1011, %v1015
      %v1034 = vunpack.c.l.b16 %v994
      %v1035 = vunpack.c.l.b16 %v995
      %v1036 = vunpack.c.l.b16 %v996
      %v1037 = vunpack.c.l.b16 %v997
      %v1038 = vunpack.c.l.b16 %v998
      %v1039 = vunpack.c.l.b16 %v999
      %v1040 = vunpack.c.l.b16 %v1000
      %v1041 = vunpack.c.l.b16 %v1001
      %v1042 = vunpack.c.l.b16 %v1002
      %v1043 = vunpack.c.l.b16 %v1003
      %v1044 = vunpack.c.l.b16 %v1004
      %v1045 = vunpack.c.l.b16 %v1005
      %v1046 = vunpack.c.l.b16 %v1006
      %v1047 = vunpack.c.l.b16 %v1007
      %v1048 = vunpack.c.l.b16 %v1008
      %v1049 = vunpack.c.l.b16 %v1009
      %v1050 = vpack.c.b16 %v1035, %v1034
      %v1051 = vpack.c.b16 %v1037, %v1036
      %v1052 = vpack.c.b16 %v1039, %v1038
      %v1053 = vpack.c.b16 %v1041, %v1040
      %v1054 = vpack.c.b16 %v1043, %v1042
      %v1055 = vpack.c.b16 %v1045, %v1044
      %v1056 = vpack.c.b16 %v1047, %v1046
      %v1057 = vpack.c.b16 %v1049, %v1048
      %1066 = vmatprep.subr.bf16.mxu0 0
      %1067 = vmatpush1.bf16.msra.mxu0 %v1050
      %1068 = vmatprep.subr.bf16.mxu0 0
      %1069 = vmatpush1.bf16.msra.mxu0 %v1051
      %1070 = vmatprep.subr.bf16.mxu0 0
      %1071 = vmatpush1.bf16.msra.mxu0 %v1052
      %1072 = vmatprep.subr.bf16.mxu0 0
      %1073 = vmatpush1.bf16.msra.mxu0 %v1053
      %1074 = vmatprep.subr.bf16.mxu0 0
      %1075 = vmatpush1.bf16.msra.mxu0 %v1054
      %1076 = vmatprep.subr.bf16.mxu0 0
      %1077 = vmatpush1.bf16.msra.mxu0 %v1055
      %1078 = vmatprep.subr.bf16.mxu0 0
      %1079 = vmatpush1.bf16.msra.mxu0 %v1056
      %1080 = vmatprep.subr.bf16.mxu0 0
      %1081 = vmatpush1.bf16.msra.mxu0 %v1057
      %1082 = vmatprep.subr.bf16.mxu0 0
      %1083 = vmatpush1.bf16.msra.mxu0 0
      %1084 = vmatprep.subr.bf16.mxu0 0
      %1085 = vmatpush1.bf16.msra.mxu0 0
      %1086 = vmatprep.subr.bf16.mxu0 0
      %1087 = vmatpush1.bf16.msra.mxu0 0
      %1088 = vmatprep.subr.bf16.mxu0 0
      %1089 = vmatpush1.bf16.msra.mxu0 0
      %1090 = vmatprep.subr.bf16.mxu0 0
      %1091 = vmatpush1.bf16.msra.mxu0 0
      %1092 = vmatprep.subr.bf16.mxu0 0
      %1093 = vmatpush1.bf16.msra.mxu0 0
      %1094 = vmatprep.subr.bf16.mxu0 0
      %1095 = vmatpush1.bf16.msra.mxu0 0
      %1096 = vmatprep.subr.bf16.mxu0 0
      %1097 = vmatpush1.bf16.msra.mxu0 0
      %1098 = vmatprep.mubr.bf16.mxu0 0
      %1099 = vmatmul.mubr.bf16.gmra.mrb[0].mxu0 %v985
      %v1100 = vpop.f32.mrb[0].mxu0
      %v1101 = vadd.f32 %v1016, %v1100
      %v1102 = vpop.f32.mrb[0].mxu0
      %v1103 = vpop.f32.mrb[0].mxu0
      %v1104 = vadd.f32 %v1016, %v1103
      %v1105 = vpop.f32.mrb[0].mxu0
      %1106 = vmatprep.mubr.bf16.mxu0 0
      %1107 = vmatmul.mubr.bf16.gmra.mrb[0].mxu0 %v986
      %v1108 = vpop.f32.mrb[0].mxu0
      %v1109 = vadd.f32 %v1016, %v1108
      %v1110 = vpop.f32.mrb[0].mxu0
      %v1111 = vpop.f32.mrb[0].mxu0
      %v1112 = vadd.f32 %v1016, %v1111
      %v1113 = vpop.f32.mrb[0].mxu0
      %1114 = vmatprep.mubr.bf16.mxu0 0
      %1115 = vmatmul.mubr.bf16.gmra.mrb[0].mxu0 %v987
      %v1116 = vpop.f32.mrb[0].mxu0
      %v1117 = vadd.f32 %v1016, %v1116
      %v1118 = vpop.f32.mrb[0].mxu0
      %v1119 = vpop.f32.mrb[0].mxu0
      %v1120 = vadd.f32 %v1016, %v1119
      %v1121 = vpop.f32.mrb[0].mxu0
      %1122 = vmatprep.mubr.bf16.mxu0 0
      %1123 = vmatmul.mubr.bf16.gmra.mrb[0].mxu0 %v988
      %v1124 = vpop.f32.mrb[0].mxu0
      %v1125 = vadd.f32 %v1016, %v1124
      %v1126 = vpop.f32.mrb[0].mxu0
      %v1127 = vpop.f32.mrb[0].mxu0
      %v1128 = vadd.f32 %v1016, %v1127
      %v1129 = vpop.f32.mrb[0].mxu0
      %1130 = vmatprep.mubr.bf16.mxu0 0
      %1131 = vmatmul.mubr.bf16.gmra.mrb[0].mxu0 %v989
      %v1132 = vpop.f32.mrb[0].mxu0
      %v1133 = vadd.f32 %v1016, %v1132
      %v1134 = vpop.f32.mrb[0].mxu0
      %v1135 = vpop.f32.mrb[0].mxu0
      %v1136 = vadd.f32 %v1016, %v1135
      %v1137 = vpop.f32.mrb[0].mxu0
      %1138 = vmatprep.mubr.bf16.mxu0 0
      %1139 = vmatmul.mubr.bf16.gmra.mrb[0].mxu0 %v990
      %v1140 = vpop.f32.mrb[0].mxu0
      %v1141 = vadd.f32 %v1016, %v1140
      %v1142 = vpop.f32.mrb[0].mxu0
      %v1143 = vpop.f32.mrb[0].mxu0
      %v1144 = vadd.f32 %v1016, %v1143
      %v1145 = vpop.f32.mrb[0].mxu0
      %1146 = vmatprep.mubr.bf16.mxu0 0
      %1147 = vmatmul.mubr.bf16.gmra.mrb[0].mxu0 %v991
      %v1148 = vpop.f32.mrb[0].mxu0
      %v1149 = vadd.f32 %v1016, %v1148
      %v1150 = vpop.f32.mrb[0].mxu0
      %v1151 = vpop.f32.mrb[0].mxu0
      %v1152 = vadd.f32 %v1016, %v1151
      %v1153 = vpop.f32.mrb[0].mxu0
      %1154 = vmatprep.mubr.bf16.mxu0 0
      %1155 = vmatmul.mubr.bf16.gmra.mrb[0].mxu0 %v992
      %v1156 = vpop.f32.mrb[0].mxu0
      %v1157 = vadd.f32 %v1016, %v1156
      %v1158 = vpop.f32.mrb[0].mxu0
      %v1159 = vpop.f32.mrb[0].mxu0
      %v1160 = vadd.f32 %v1016, %v1159
      %v1161 = vpop.f32.mrb[0].mxu0
      %1162 = vdwg.mxu0
      %v1163 = vmax.f32 %v1101, 0.0
      %v1164 = vmax.f32 %v1104, 0.0
      %v1165 = vmax.f32 %v1109, 0.0
      %v1166 = vmax.f32 %v1112, 0.0
      %v1167 = vmax.f32 %v1117, 0.0
      %v1168 = vmax.f32 %v1120, 0.0
      %v1169 = vmax.f32 %v1125, 0.0
      %v1170 = vmax.f32 %v1128, 0.0
      %v1171 = vmax.f32 %v1133, 0.0
      %v1172 = vmax.f32 %v1136, 0.0
      %v1173 = vmax.f32 %v1141, 0.0
      %v1174 = vmax.f32 %v1144, 0.0
      %v1175 = vmax.f32 %v1149, 0.0
      %v1176 = vmax.f32 %v1152, 0.0
      %v1177 = vmax.f32 %v1157, 0.0
      %v1178 = vmax.f32 %v1160, 0.0
      %v1179 = vpack.c.bf16 %v1164, %v1163
      %v1180 = vpack.c.bf16 %v1166, %v1165
      %v1181 = vpack.c.bf16 %v1168, %v1167
      %v1182 = vpack.c.bf16 %v1170, %v1169
      %v1183 = vpack.c.bf16 %v1172, %v1171
      %v1184 = vpack.c.bf16 %v1174, %v1173
      %v1185 = vpack.c.bf16 %v1176, %v1175
      %v1186 = vpack.c.bf16 %v1178, %v1177
      %s1187 = scalar_lea.vmem %s5, 64
      %v1188 = vld [vmem:[%s1187] sm:$0xf]
      %v1189 = vld [vmem:[%s1187 + $0x4] sm:$0xf]
      %v1190 = vld [vmem:[%s1187 + $0x8] sm:$0xf]
      %v1191 = vld [vmem:[%s1187 + $0xc] sm:$0xf]
      %v1192 = vld [vmem:[%s1187 + $0x10] sm:$0xf]
      %v1193 = vld [vmem:[%s1187 + $0x14] sm:$0xf]
      %v1194 = vld [vmem:[%s1187 + $0x18] sm:$0xf]
      %v1195 = vld [vmem:[%s1187 + $0x1c] sm:$0xf]
      %v1196 = vld [vmem:[%s1187 + $0x20] sm:$0xf]
      %v1197 = vld [vmem:[%s1187 + $0x24] sm:$0xf]
      %v1198 = vld [vmem:[%s1187 + $0x28] sm:$0xf]
      %v1199 = vld [vmem:[%s1187 + $0x2c] sm:$0xf]
      %v1200 = vld [vmem:[%s1187 + $0x30] sm:$0xf]
      %v1201 = vld [vmem:[%s1187 + $0x34] sm:$0xf]
      %v1202 = vld [vmem:[%s1187 + $0x38] sm:$0xf]
      %v1203 = vld [vmem:[%s1187 + $0x3c] sm:$0xf]
      %s1204 = scalar_lea.vmem %s6, 1
      %v1205 = vld [vmem:[%s1204] sm:$0x1]
      %v1207 = vlaneseq
      %v1208 = vshrl.u32 %v1207, 7
      %v1209 = vsub.s32 0, %v1208
      %v1210 = vrot.slane %v1205, %v1209
      %v1228 = vunpack.c.l.b16 %v1188
      %v1229 = vunpack.c.l.b16 %v1189
      %v1230 = vunpack.c.l.b16 %v1190
      %v1231 = vunpack.c.l.b16 %v1191
      %v1232 = vunpack.c.l.b16 %v1192
      %v1233 = vunpack.c.l.b16 %v1193
      %v1234 = vunpack.c.l.b16 %v1194
      %v1235 = vunpack.c.l.b16 %v1195
      %v1236 = vunpack.c.l.b16 %v1196
      %v1237 = vunpack.c.l.b16 %v1197
      %v1238 = vunpack.c.l.b16 %v1198
      %v1239 = vunpack.c.l.b16 %v1199
      %v1240 = vunpack.c.l.b16 %v1200
      %v1241 = vunpack.c.l.b16 %v1201
      %v1242 = vunpack.c.l.b16 %v1202
      %v1243 = vunpack.c.l.b16 %v1203
      %v1244 = vpack.c.b16 %v1229, %v1228
      %v1245 = vpack.c.b16 %v1231, %v1230
      %v1246 = vpack.c.b16 %v1233, %v1232
      %v1247 = vpack.c.b16 %v1235, %v1234
      %v1248 = vpack.c.b16 %v1237, %v1236
      %v1249 = vpack.c.b16 %v1239, %v1238
      %v1250 = vpack.c.b16 %v1241, %v1240
      %v1251 = vpack.c.b16 %v1243, %v1242
      %1260 = vmatprep.subr.bf16.mxu0 0
      %1261 = vmatpush1.bf16.msra.mxu0 %v1244
      %1262 = vmatprep.subr.bf16.mxu0 0
      %1263 = vmatpush1.bf16.msra.mxu0 %v1245
      %1264 = vmatprep.subr.bf16.mxu0 0
      %1265 = vmatpush1.bf16.msra.mxu0 %v1246
      %1266 = vmatprep.subr.bf16.mxu0 0
      %1267 = vmatpush1.bf16.msra.mxu0 %v1247
      %1268 = vmatprep.subr.bf16.mxu0 0
      %1269 = vmatpush1.bf16.msra.mxu0 %v1248
      %1270 = vmatprep.subr.bf16.mxu0 0
      %1271 = vmatpush1.bf16.msra.mxu0 %v1249
      %1272 = vmatprep.subr.bf16.mxu0 0
      %1273 = vmatpush1.bf16.msra.mxu0 %v1250
      %1274 = vmatprep.subr.bf16.mxu0 0
      %1275 = vmatpush1.bf16.msra.mxu0 %v1251
      %1276 = vmatprep.subr.bf16.mxu0 0
      %1277 = vmatpush1.bf16.msra.mxu0 0
      %1278 = vmatprep.subr.bf16.mxu0 0
      %1279 = vmatpush1.bf16.msra.mxu0 0
      %1280 = vmatprep.subr.bf16.mxu0 0
      %1281 = vmatpush1.bf16.msra.mxu0 0
      %1282 = vmatprep.subr.bf16.mxu0 0
      %1283 = vmatpush1.bf16.msra.mxu0 0
      %1284 = vmatprep.subr.bf16.mxu0 0
      %1285 = vmatpush1.bf16.msra.mxu0 0
      %1286 = vmatprep.subr.bf16.mxu0 0
      %1287 = vmatpush1.bf16.msra.mxu0 0
      %1288 = vmatprep.subr.bf16.mxu0 0
      %1289 = vmatpush1.bf16.msra.mxu0 0
      %1290 = vmatprep.subr.bf16.mxu0 0
      %1291 = vmatpush1.bf16.msra.mxu0 0
      %1292 = vmatprep.mubr.bf16.mxu0 0
      %1293 = vmatmul.mubr.bf16.gmra.mrb[0].mxu0 %v1179
      %v1294 = vpop.f32.mrb[0].mxu0
      %v1295 = vadd.f32 %v1210, %v1294
      %v1296 = vpop.f32.mrb[0].mxu0
      %v1297 = vpop.f32.mrb[0].mxu0
      %v1298 = vadd.f32 %v1210, %v1297
      %v1299 = vpop.f32.mrb[0].mxu0
      %1300 = vmatprep.mubr.bf16.mxu0 0
      %1301 = vmatmul.mubr.bf16.gmra.mrb[0].mxu0 %v1180
      %v1302 = vpop.f32.mrb[0].mxu0
      %v1303 = vadd.f32 %v1210, %v1302
      %v1304 = vpop.f32.mrb[0].mxu0
      %v1305 = vpop.f32.mrb[0].mxu0
      %v1306 = vadd.f32 %v1210, %v1305
      %v1307 = vpop.f32.mrb[0].mxu0
      %1308 = vmatprep.mubr.bf16.mxu0 0
      %1309 = vmatmul.mubr.bf16.gmra.mrb[0].mxu0 %v1181
      %v1310 = vpop.f32.mrb[0].mxu0
      %v1311 = vadd.f32 %v1210, %v1310
      %v1312 = vpop.f32.mrb[0].mxu0
      %v1313 = vpop.f32.mrb[0].mxu0
      %v1314 = vadd.f32 %v1210, %v1313
      %v1315 = vpop.f32.mrb[0].mxu0
      %1316 = vmatprep.mubr.bf16.mxu0 0
      %1317 = vmatmul.mubr.bf16.gmra.mrb[0].mxu0 %v1182
      %v1318 = vpop.f32.mrb[0].mxu0
      %v1319 = vadd.f32 %v1210, %v1318
      %v1320 = vpop.f32.mrb[0].mxu0
      %v1321 = vpop.f32.mrb[0].mxu0
      %v1322 = vadd.f32 %v1210, %v1321
      %v1323 = vpop.f32.mrb[0].mxu0
      %1324 = vmatprep.mubr.bf16.mxu0 0
      %1325 = vmatmul.mubr.bf16.gmra.mrb[0].mxu0 %v1183
      %v1326 = vpop.f32.mrb[0].mxu0
      %v1327 = vadd.f32 %v1210, %v1326
      %v1328 = vpop.f32.mrb[0].mxu0
      %v1329 = vpop.f32.mrb[0].mxu0
      %v1330 = vadd.f32 %v1210, %v1329
      %v1331 = vpop.f32.mrb[0].mxu0
      %1332 = vmatprep.mubr.bf16.mxu0 0
      %1333 = vmatmul.mubr.bf16.gmra.mrb[0].mxu0 %v1184
      %v1334 = vpop.f32.mrb[0].mxu0
      %v1335 = vadd.f32 %v1210, %v1334
      %v1336 = vpop.f32.mrb[0].mxu0
      %v1337 = vpop.f32.mrb[0].mxu0
      %v1338 = vadd.f32 %v1210, %v1337
      %v1339 = vpop.f32.mrb[0].mxu0
      %1340 = vmatprep.mubr.bf16.mxu0 0
      %1341 = vmatmul.mubr.bf16.gmra.mrb[0].mxu0 %v1185
      %v1342 = vpop.f32.mrb[0].mxu0
      %v1343 = vadd.f32 %v1210, %v1342
      %v1344 = vpop.f32.mrb[0].mxu0
      %v1345 = vpop.f32.mrb[0].mxu0
      %v1346 = vadd.f32 %v1210, %v1345
      %v1347 = vpop.f32.mrb[0].mxu0
      %1348 = vmatprep.mubr.bf16.mxu0 0
      %1349 = vmatmul.mubr.bf16.gmra.mrb[0].mxu0 %v1186
      %v1350 = vpop.f32.mrb[0].mxu0
      %v1351 = vadd.f32 %v1210, %v1350
      %v1352 = vpop.f32.mrb[0].mxu0
      %v1353 = vpop.f32.mrb[0].mxu0
      %v1354 = vadd.f32 %v1210, %v1353
      %v1355 = vpop.f32.mrb[0].mxu0
      %1356 = vdwg.mxu0
      %v1357 = vadd.f32 %v1295, %v969
      %v1358 = vadd.f32 %v1298, %v970
      %v1359 = vadd.f32 %v1303, %v971
      %v1360 = vadd.f32 %v1306, %v972
      %v1361 = vadd.f32 %v1311, %v973
      %v1362 = vadd.f32 %v1314, %v974
      %v1363 = vadd.f32 %v1319, %v975
      %v1364 = vadd.f32 %v1322, %v976
      %v1365 = vadd.f32 %v1327, %v977
      %v1366 = vadd.f32 %v1330, %v978
      %v1367 = vadd.f32 %v1335, %v979
      %v1368 = vadd.f32 %v1338, %v980
      %v1369 = vadd.f32 %v1343, %v981
      %v1370 = vadd.f32 %v1346, %v982
      %v1371 = vadd.f32 %v1351, %v983
      %v1372 = vadd.f32 %v1354, %v984
      %v1373 = vmax.f32 %v1357, 0.0
      %v1374 = vmax.f32 %v1358, 0.0
      %v1375 = vmax.f32 %v1359, 0.0
      %v1376 = vmax.f32 %v1360, 0.0
      %v1377 = vmax.f32 %v1361, 0.0
      %v1378 = vmax.f32 %v1362, 0.0
      %v1379 = vmax.f32 %v1363, 0.0
      %v1380 = vmax.f32 %v1364, 0.0
      %v1381 = vmax.f32 %v1365, 0.0
      %v1382 = vmax.f32 %v1366, 0.0
      %v1383 = vmax.f32 %v1367, 0.0
      %v1384 = vmax.f32 %v1368, 0.0
      %v1385 = vmax.f32 %v1369, 0.0
      %v1386 = vmax.f32 %v1370, 0.0
      %v1387 = vmax.f32 %v1371, 0.0
      %v1388 = vmax.f32 %v1372, 0.0
      %v1389 = vpack.c.bf16 %v1374, %v1373
      %v1390 = vpack.c.bf16 %v1376, %v1375
      %v1391 = vpack.c.bf16 %v1378, %v1377
      %v1392 = vpack.c.bf16 %v1380, %v1379
      %v1393 = vpack.c.bf16 %v1382, %v1381
      %v1394 = vpack.c.bf16 %v1384, %v1383
      %v1395 = vpack.c.bf16 %v1386, %v1385
      %v1396 = vpack.c.bf16 %v1388, %v1387
      %v1397 = vld [vmem:[%s7] sm:$0xf]
      %v1398 = vld [vmem:[%s7 + $0x4] sm:$0xf]
      %v1399 = vld [vmem:[%s7 + $0x8] sm:$0xf]
      %v1400 = vld [vmem:[%s7 + $0xc] sm:$0xf]
      %v1401 = vld [vmem:[%s7 + $0x10] sm:$0xf]
      %v1402 = vld [vmem:[%s7 + $0x14] sm:$0xf]
      %v1403 = vld [vmem:[%s7 + $0x18] sm:$0xf]
      %v1404 = vld [vmem:[%s7 + $0x1c] sm:$0xf]
      %v1405 = vld [vmem:[%s7 + $0x20] sm:$0xf]
      %v1406 = vld [vmem:[%s7 + $0x24] sm:$0xf]
      %v1407 = vld [vmem:[%s7 + $0x28] sm:$0xf]
      %v1408 = vld [vmem:[%s7 + $0x2c] sm:$0xf]
      %v1409 = vld [vmem:[%s7 + $0x30] sm:$0xf]
      %v1410 = vld [vmem:[%s7 + $0x34] sm:$0xf]
      %v1411 = vld [vmem:[%s7 + $0x38] sm:$0xf]
      %v1412 = vld [vmem:[%s7 + $0x3c] sm:$0xf]
      %v1413 = vld [vmem:[%s8] sm:$0x1]
      %v1415 = vlaneseq
      %v1416 = vshrl.u32 %v1415, 7
      %v1417 = vsub.s32 0, %v1416
      %v1418 = vrot.slane %v1413, %v1417
      %v1436 = vunpack.c.l.b16 %v1397
      %v1437 = vunpack.c.l.b16 %v1398
      %v1438 = vunpack.c.l.b16 %v1399
      %v1439 = vunpack.c.l.b16 %v1400
      %v1440 = vunpack.c.l.b16 %v1401
      %v1441 = vunpack.c.l.b16 %v1402
      %v1442 = vunpack.c.l.b16 %v1403
      %v1443 = vunpack.c.l.b16 %v1404
      %v1444 = vunpack.c.l.b16 %v1405
      %v1445 = vunpack.c.l.b16 %v1406
      %v1446 = vunpack.c.l.b16 %v1407
      %v1447 = vunpack.c.l.b16 %v1408
      %v1448 = vunpack.c.l.b16 %v1409
      %v1449 = vunpack.c.l.b16 %v1410
      %v1450 = vunpack.c.l.b16 %v1411
      %v1451 = vunpack.c.l.b16 %v1412
      %v1452 = vpack.c.b16 %v1437, %v1436
      %v1453 = vpack.c.b16 %v1439, %v1438
      %v1454 = vpack.c.b16 %v1441, %v1440
      %v1455 = vpack.c.b16 %v1443, %v1442
      %v1456 = vpack.c.b16 %v1445, %v1444
      %v1457 = vpack.c.b16 %v1447, %v1446
      %v1458 = vpack.c.b16 %v1449, %v1448
      %v1459 = vpack.c.b16 %v1451, %v1450
      %1468 = vmatprep.subr.bf16.mxu0 0
      %1469 = vmatpush1.bf16.msra.mxu0 %v1452
      %1470 = vmatprep.subr.bf16.mxu0 0
      %1471 = vmatpush1.bf16.msra.mxu0 %v1453
      %1472 = vmatprep.subr.bf16.mxu0 0
      %1473 = vmatpush1.bf16.msra.mxu0 %v1454
      %1474 = vmatprep.subr.bf16.mxu0 0
      %1475 = vmatpush1.bf16.msra.mxu0 %v1455
      %1476 = vmatprep.subr.bf16.mxu0 0
      %1477 = vmatpush1.bf16.msra.mxu0 %v1456
      %1478 = vmatprep.subr.bf16.mxu0 0
      %1479 = vmatpush1.bf16.msra.mxu0 %v1457
      %1480 = vmatprep.subr.bf16.mxu0 0
      %1481 = vmatpush1.bf16.msra.mxu0 %v1458
      %1482 = vmatprep.subr.bf16.mxu0 0
      %1483 = vmatpush1.bf16.msra.mxu0 %v1459
      %1484 = vmatprep.subr.bf16.mxu0 0
      %1485 = vmatpush1.bf16.msra.mxu0 0
      %1486 = vmatprep.subr.bf16.mxu0 0
      %1487 = vmatpush1.bf16.msra.mxu0 0
      %1488 = vmatprep.subr.bf16.mxu0 0
      %1489 = vmatpush1.bf16.msra.mxu0 0
      %1490 = vmatprep.subr.bf16.mxu0 0
      %1491 = vmatpush1.bf16.msra.mxu0 0
      %1492 = vmatprep.subr.bf16.mxu0 0
      %1493 = vmatpush1.bf16.msra.mxu0 0
      %1494 = vmatprep.subr.bf16.mxu0 0
      %1495 = vmatpush1.bf16.msra.mxu0 0
      %1496 = vmatprep.subr.bf16.mxu0 0
      %1497 = vmatpush1.bf16.msra.mxu0 0
      %1498 = vmatprep.subr.bf16.mxu0 0
      %1499 = vmatpush1.bf16.msra.mxu0 0
      %1500 = vmatprep.mubr.bf16.mxu0 0
      %1501 = vmatmul.mubr.bf16.gmra.mrb[0].mxu0 %v1389
      %v1502 = vpop.f32.mrb[0].mxu0
      %v1503 = vadd.f32 %v1418, %v1502
      %v1504 = vpop.f32.mrb[0].mxu0
      %v1505 = vpop.f32.mrb[0].mxu0
      %v1506 = vadd.f32 %v1418, %v1505
      %v1507 = vpop.f32.mrb[0].mxu0
      %1508 = vmatprep.mubr.bf16.mxu0 0
      %1509 = vmatmul.mubr.bf16.gmra.mrb[0].mxu0 %v1390
      %v1510 = vpop.f32.mrb[0].mxu0
      %v1511 = vadd.f32 %v1418, %v1510
      %v1512 = vpop.f32.mrb[0].mxu0
      %v1513 = vpop.f32.mrb[0].mxu0
      %v1514 = vadd.f32 %v1418, %v1513
      %v1515 = vpop.f32.mrb[0].mxu0
      %1516 = vmatprep.mubr.bf16.mxu0 0
      %1517 = vmatmul.mubr.bf16.gmra.mrb[0].mxu0 %v1391
      %v1518 = vpop.f32.mrb[0].mxu0
      %v1519 = vadd.f32 %v1418, %v1518
      %v1520 = vpop.f32.mrb[0].mxu0
      %v1521 = vpop.f32.mrb[0].mxu0
      %v1522 = vadd.f32 %v1418, %v1521
      %v1523 = vpop.f32.mrb[0].mxu0
      %1524 = vmatprep.mubr.bf16.mxu0 0
      %1525 = vmatmul.mubr.bf16.gmra.mrb[0].mxu0 %v1392
      %v1526 = vpop.f32.mrb[0].mxu0
      %v1527 = vadd.f32 %v1418, %v1526
      %v1528 = vpop.f32.mrb[0].mxu0
      %v1529 = vpop.f32.mrb[0].mxu0
      %v1530 = vadd.f32 %v1418, %v1529
      %v1531 = vpop.f32.mrb[0].mxu0
      %1532 = vmatprep.mubr.bf16.mxu0 0
      %1533 = vmatmul.mubr.bf16.gmra.mrb[0].mxu0 %v1393
      %v1534 = vpop.f32.mrb[0].mxu0
      %v1535 = vadd.f32 %v1418, %v1534
      %v1536 = vpop.f32.mrb[0].mxu0
      %v1537 = vpop.f32.mrb[0].mxu0
      %v1538 = vadd.f32 %v1418, %v1537
      %v1539 = vpop.f32.mrb[0].mxu0
      %1540 = vmatprep.mubr.bf16.mxu0 0
      %1541 = vmatmul.mubr.bf16.gmra.mrb[0].mxu0 %v1394
      %v1542 = vpop.f32.mrb[0].mxu0
      %v1543 = vadd.f32 %v1418, %v1542
      %v1544 = vpop.f32.mrb[0].mxu0
      %v1545 = vpop.f32.mrb[0].mxu0
      %v1546 = vadd.f32 %v1418, %v1545
      %v1547 = vpop.f32.mrb[0].mxu0
      %1548 = vmatprep.mubr.bf16.mxu0 0
      %1549 = vmatmul.mubr.bf16.gmra.mrb[0].mxu0 %v1395
      %v1550 = vpop.f32.mrb[0].mxu0
      %v1551 = vadd.f32 %v1418, %v1550
      %v1552 = vpop.f32.mrb[0].mxu0
      %v1553 = vpop.f32.mrb[0].mxu0
      %v1554 = vadd.f32 %v1418, %v1553
      %v1555 = vpop.f32.mrb[0].mxu0
      %1556 = vmatprep.mubr.bf16.mxu0 0
      %1557 = vmatmul.mubr.bf16.gmra.mrb[0].mxu0 %v1396
      %v1558 = vpop.f32.mrb[0].mxu0
      %v1559 = vadd.f32 %v1418, %v1558
      %v1560 = vpop.f32.mrb[0].mxu0
      %v1561 = vpop.f32.mrb[0].mxu0
      %v1562 = vadd.f32 %v1418, %v1561
      %v1563 = vpop.f32.mrb[0].mxu0
      %1564 = vdwg.mxu0
      %v1565 = vpack.c.bf16 %v1506, %v1503
      %v1566 = vpack.c.bf16 %v1514, %v1511
      %v1567 = vpack.c.bf16 %v1522, %v1519
      %v1568 = vpack.c.bf16 %v1530, %v1527
      %v1569 = vpack.c.bf16 %v1538, %v1535
      %v1570 = vpack.c.bf16 %v1546, %v1543
      %v1571 = vpack.c.bf16 %v1554, %v1551
      %v1572 = vpack.c.bf16 %v1562, %v1559
      %v1581 = vunpack.c.l.b16 %v1565
      %v1582 = vunpack.c.h.b16 %v1565
      %v1583 = vunpack.c.l.b16 %v1566
      %v1584 = vunpack.c.h.b16 %v1566
      %v1585 = vunpack.c.l.b16 %v1567
      %v1586 = vunpack.c.h.b16 %v1567
      %v1587 = vunpack.c.l.b16 %v1568
      %v1588 = vunpack.c.h.b16 %v1568
      %v1589 = vunpack.c.l.b16 %v1569
      %v1590 = vunpack.c.h.b16 %v1569
      %v1591 = vunpack.c.l.b16 %v1570
      %v1592 = vunpack.c.h.b16 %v1570
      %v1593 = vunpack.c.l.b16 %v1571
      %v1594 = vunpack.c.h.b16 %v1571
      %v1595 = vunpack.c.l.b16 %v1572
      %v1596 = vunpack.c.h.b16 %v1572
      %v1597 = vpack.c.b16 %v1581, %v1581
      %v1598 = vpack.c.b16 %v1582, %v1582
      %v1599 = vpack.c.b16 %v1583, %v1583
      %v1600 = vpack.c.b16 %v1584, %v1584
      %v1601 = vpack.c.b16 %v1585, %v1585
      %v1602 = vpack.c.b16 %v1586, %v1586
      %v1603 = vpack.c.b16 %v1587, %v1587
      %v1604 = vpack.c.b16 %v1588, %v1588
      %v1605 = vpack.c.b16 %v1589, %v1589
      %v1606 = vpack.c.b16 %v1590, %v1590
      %v1607 = vpack.c.b16 %v1591, %v1591
      %v1608 = vpack.c.b16 %v1592, %v1592
      %v1609 = vpack.c.b16 %v1593, %v1593
      %v1610 = vpack.c.b16 %v1594, %v1594
      %v1611 = vpack.c.b16 %v1595, %v1595
      %v1612 = vpack.c.b16 %v1596, %v1596
      %1629 = vst [vmem:[%s334] sm:$0xf] %v1597
      %1630 = vst [vmem:[%s334 + $0x4] sm:$0xf] %v1598
      %1631 = vst [vmem:[%s334 + $0x8] sm:$0xf] %v1599
      %1632 = vst [vmem:[%s334 + $0xc] sm:$0xf] %v1600
      %1633 = vst [vmem:[%s334 + $0x10] sm:$0xf] %v1601
      %1634 = vst [vmem:[%s334 + $0x14] sm:$0xf] %v1602
      %1635 = vst [vmem:[%s334 + $0x18] sm:$0xf] %v1603
      %1636 = vst [vmem:[%s334 + $0x1c] sm:$0xf] %v1604
      %1637 = vst [vmem:[%s334 + $0x20] sm:$0xf] %v1605
      %1638 = vst [vmem:[%s334 + $0x24] sm:$0xf] %v1606
      %1639 = vst [vmem:[%s334 + $0x28] sm:$0xf] %v1607
      %1640 = vst [vmem:[%s334 + $0x2c] sm:$0xf] %v1608
      %1641 = vst [vmem:[%s334 + $0x30] sm:$0xf] %v1609
      %1642 = vst [vmem:[%s334 + $0x34] sm:$0xf] %v1610
      %1643 = vst [vmem:[%s334 + $0x38] sm:$0xf] %v1611
      %1644 = vst [vmem:[%s334 + $0x3c] sm:$0xf] %v1612
      %s1645 = smul.u32 16, %s20
      %p1646 = scmp.lt.s32.totalorder %s1645, 31
      %s1647 = scalar_select %p1646, %s1645, 31
      %s1648 = smul.addr %s1647, 4
      %s1649 = scalar_lea.vmem %s9, %s1648
      // Predicated region
      $region57: #{_lambda_.1} parent=55 // pred_check
        %p1650 = pneg %p232
      $region58: #{_lambda_.1} parent=55 // pred_check_branch
        %1652 = sbr.rel (%p1650) target = $region60
      $region59: #{_lambda_.1} parent=55 // pred_region
        %s1653 = smul.u32 16, %s20
      $region60: #{_lambda_.1} parent=55 // pred_fallthru
        _
    $region56: #{_lambda_.1} parent=5 // pred_fallthru
      _
    %p1654 = scmp.le.s32.totalorder 2, %s15
    // Predicated region
    $region61: #{_lambda_.1} parent=5 // pred_check
      %p1655 = pneg %p1654
    $region62: #{_lambda_.1} parent=5 // pred_check_branch
      %1657 = sbr.rel (%p1655) target = $region64
    $region63: #{_lambda_.1} parent=5 // pred_region
      %s1658 = ssub.s32 %s15, 2
      // Predicated region
      $region65: #{_lambda_.1} parent=63 // pred_check
        %p1659 = pneg %p238
      $region66: #{_lambda_.1} parent=63 // pred_check_branch
        %1661 = sbr.rel (%p1659) target = $region68
      $region67: #{_lambda_.1} parent=63 // pred_region
        %s1662 = smul.u32 16, %s21
        %p1663 = scmp.lt.s32.totalorder %s1662, 31
        %s1664 = scalar_select %p1663, %s1662, 31
        %s1665 = smul.addr %s1664, 4
        %s1666 = scalar_lea.vmem %s9, %s1665
      $region68: #{_lambda_.1} parent=63 // pred_fallthru
        _
    $region64: #{_lambda_.1} parent=5 // pred_fallthru
      _
  $region6: #{_lambda_.1} parent=0 // loop_footer
    %s19 = sadd.s32 1, %s15
  $region7: #{_lambda_.1} parent=0 // loop_footer_branch
    %14 = sbr.rel target = $region3
  $region8: #{_lambda_.1} parent=0 // loop_exit
    _

</llo_original>
